<compile_context>
chip_gen: v7x
topology: tpu7x:2x2x1
jax: 0.10.0
libtpu: 0.0.40
codegen_flags: <defaults>
</compile_context>

<pallas_src>
import math

import jax
import jax.numpy as jnp
from jax.experimental import pallas as pl
from jax.experimental.pallas import tpu as pltpu

# ----------------------------- config ---------------------------------------
B = 2           # batch
S = 8           # sequence length
D = 64          # hidden size          (768 in real GPT-2)
H = 4           # attention heads      (12 in real GPT-2)
DH = D // H     # head dim
FFN = 4 * D     # MLP inner dim
VOCAB = 128     # vocab size           (50257 in real GPT-2)
NPOS = 32       # max positions
NLAYER = 2      # transformer blocks   (12 in real GPT-2)
LN_EPS = 1e-5
TN = 128        # vocab-projection tile (multiple of 128; larger at real scale)
VMEM_LIMIT = 48 * 1024 * 1024


# --------------------------- kernel helpers ---------------------------------
def _layernorm(x, g, b):
    mu = jnp.mean(x, axis=-1, keepdims=True)
    var = jnp.mean((x - mu) ** 2, axis=-1, keepdims=True)
    return (x - mu) * jax.lax.rsqrt(var + LN_EPS) * g + b


# -------------------- fused transformer-stack kernel ------------------------
# grid = (B, NLAYER); batch axis "parallel", layer axis "arbitrary".
# The residual stream is kept in a f32 VMEM scratch across the layer axis.
def gpt2_stack_kernel(x_ref, lnp_ref, bqkv_ref, bfc_ref,
                      wqkv_ref, wproj_ref, wfc_ref, wout_ref,
                      o_ref, acc_ref):
    l = pl.program_id(1)

    @pl.when(l == 0)
    def _():
        acc_ref[...] = x_ref[0].astype(jnp.float32)

    x = acc_ref[...]                                   # (S, D) f32 residual stream

    lnp = lnp_ref[0]                                   # (6, D) packed small params
    ln1g, ln1b = lnp[0:1, :], lnp[1:2, :]
    ln2g, ln2b = lnp[2:3, :], lnp[3:4, :]
    bproj, bout = lnp[4:5, :], lnp[5:6, :]

    # ---- attention branch ---------------------------------------------------
    h = _layernorm(x, ln1g, ln1b).astype(jnp.bfloat16)
    qkv = jnp.dot(h, wqkv_ref[0], preferred_element_type=jnp.float32) + bqkv_ref[0]
    qkv16 = qkv.astype(jnp.bfloat16)                   # (S, 3D)

    # batched head math: (H, S, DH) operands, two fat batched matmuls
    q = jnp.transpose(qkv16[:, 0 * D:1 * D].reshape(S, H, DH), (1, 0, 2))
    k = jnp.transpose(qkv16[:, 1 * D:2 * D].reshape(S, H, DH), (1, 0, 2))
    v = jnp.transpose(qkv16[:, 2 * D:3 * D].reshape(S, H, DH), (1, 0, 2))

    s = jnp.einsum('hqd,hkd->hqk', q, k,
                   preferred_element_type=jnp.float32) * (1.0 / math.sqrt(DH))
    row = jax.lax.broadcasted_iota(jnp.int32, (1, S, S), 1)
    col = jax.lax.broadcasted_iota(jnp.int32, (1, S, S), 2)
    s = jnp.where(row >= col, s, -1e9)                 # causal mask
    s = s - jnp.max(s, axis=-1, keepdims=True)
    p = jnp.exp(s)
    p = p * pl.reciprocal(jnp.sum(p, axis=-1, keepdims=True), approx=True)

    ctx = jnp.einsum('hqk,hkd->hqd', p.astype(jnp.bfloat16), v,
                     preferred_element_type=jnp.float32)          # (H, S, DH)
    attn = jnp.transpose(ctx, (1, 0, 2)).reshape(S, D).astype(jnp.bfloat16)
    attn = jnp.dot(attn, wproj_ref[0], preferred_element_type=jnp.float32) + bproj
    x = x + attn                                       # residual 1

    # ---- MLP branch ----------------------------------------------------------
    h2 = _layernorm(x, ln2g, ln2b).astype(jnp.bfloat16)
    m = jnp.dot(h2, wfc_ref[0], preferred_element_type=jnp.float32) + bfc_ref[0]
    m = jax.nn.gelu(m, approximate=True)               # GPT-2 "gelu_new"
    m = jnp.dot(m.astype(jnp.bfloat16), wout_ref[0],
                preferred_element_type=jnp.float32) + bout
    x = x + m                                          # residual 2

    acc_ref[...] = x

    @pl.when(l == pl.num_programs(1) - 1)
    def _():
        o_ref[0] = x.astype(o_ref.dtype)


def run_blocks(x, p):
    return pl.pallas_call(
        gpt2_stack_kernel,
        out_shape=jax.ShapeDtypeStruct((B, S, D), jnp.float32),
        grid=(B, NLAYER),
        in_specs=[
            pl.BlockSpec((1, S, D),       lambda b, l: (b, 0, 0)),   # x
            pl.BlockSpec((1, 6, D),       lambda b, l: (l, 0, 0)),   # ln/bias pack
            pl.BlockSpec((1, 1, 3 * D),   lambda b, l: (l, 0, 0)),   # bqkv
            pl.BlockSpec((1, 1, FFN),     lambda b, l: (l, 0, 0)),   # bfc
            pl.BlockSpec((1, D, 3 * D),   lambda b, l: (l, 0, 0)),   # wqkv (bf16)
            pl.BlockSpec((1, D, D),       lambda b, l: (l, 0, 0)),   # wproj (bf16)
            pl.BlockSpec((1, D, FFN),     lambda b, l: (l, 0, 0)),   # wfc (bf16)
            pl.BlockSpec((1, FFN, D),     lambda b, l: (l, 0, 0)),   # wout (bf16)
        ],
        out_specs=pl.BlockSpec((1, S, D), lambda b, l: (b, 0, 0)),
        scratch_shapes=[pltpu.VMEM((S, D), jnp.float32)],
        compiler_params=pltpu.CompilerParams(
            dimension_semantics=("parallel", "arbitrary"),
            vmem_limit_bytes=VMEM_LIMIT),
    )(x, p["ln_pack"], p["bqkv"], p["bfc"],
      p["wqkv"], p["wproj"], p["wfc"], p["wout"])


# --------------------- final LN + vocab projection kernel --------------------
# grid = (B, VOCAB // TN): vocab projection tiled over the N (vocab) dim so the
# weight streams through VMEM and the output stores are lane-dense.
def lnf_proj_kernel(x_ref, lnfg_ref, lnfb_ref, wp_ref, bp_ref, o_ref):
    x = x_ref[0].astype(jnp.float32)                   # (S, D)
    h = _layernorm(x, lnfg_ref[...], lnfb_ref[...]).astype(jnp.bfloat16)
    # nn.Dropout(0.1) in eval mode is the identity.
    # TODO(synk): train-mode dropout (random masking) not implemented; eval semantics used.
    logits = jnp.dot(h, wp_ref[...], preferred_element_type=jnp.float32) + bp_ref[...]
    o_ref[0] = logits.astype(o_ref.dtype)


def run_final(x, lnfg, lnfb, wp, bp):
    return pl.pallas_call(
        lnf_proj_kernel,
        out_shape=jax.ShapeDtypeStruct((B, S, VOCAB), jnp.float32),
        grid=(B, VOCAB // TN),
        in_specs=[
            pl.BlockSpec((1, S, D), lambda b, n: (b, 0, 0)),
            pl.BlockSpec((1, D),    lambda b, n: (0, 0)),
            pl.BlockSpec((1, D),    lambda b, n: (0, 0)),
            pl.BlockSpec((D, TN),   lambda b, n: (0, n)),            # wp (bf16) tile
            pl.BlockSpec((1, TN),   lambda b, n: (0, n)),
        ],
        out_specs=pl.BlockSpec((1, S, TN), lambda b, n: (b, 0, n)),
        compiler_params=pltpu.CompilerParams(
            dimension_semantics=("parallel", "parallel"),
            vmem_limit_bytes=VMEM_LIMIT),
    )(x, lnfg, lnfb, wp, bp)


# ------------------------------ parameters -----------------------------------
def init_params(key):
    def nrm(k, shape):
        return (0.02 * jax.random.normal(k, shape)).astype(jnp.float32)

    k = jax.random.split(key, 8)

    # packed per-layer small params: rows = [ln1g, ln1b, ln2g, ln2b, bproj, bout]
    ln_pack = jnp.zeros((NLAYER, 6, D), jnp.float32)
    ln_pack = ln_pack.at[:, 0].set(1.0).at[:, 2].set(1.0)

    params = {
        "wte": nrm(k[0], (VOCAB, D)),
        "wpe": nrm(k[1], (NPOS, D)),
        # stacked per-layer weights, bf16 for MXU / halved HBM traffic
        "wqkv":  nrm(k[2], (NLAYER, D, 3 * D)).astype(jnp.bfloat16),
        "wproj": nrm(k[3], (NLAYER, D, D)).astype(jnp.bfloat16),
        "wfc":   nrm(k[4], (NLAYER, D, FFN)).astype(jnp.bfloat16),
        "wout":  nrm(k[5], (NLAYER, FFN, D)).astype(jnp.bfloat16),
        "ln_pack": ln_pack,
        "bqkv": jnp.zeros((NLAYER, 1, 3 * D), jnp.float32),
        "bfc":  jnp.zeros((NLAYER, 1, FFN), jnp.float32),
        # final LN + projection (nn.Linear(768, vocab)), weight stored [D, V]
        "lnf_g": jnp.ones((1, D), jnp.float32),
        "lnf_b": jnp.zeros((1, D), jnp.float32),
        "wp": nrm(k[6], (D, VOCAB)).astype(jnp.bfloat16),
        "bp": jnp.zeros((1, VOCAB), jnp.float32),
    }
    return params


# ------------------------------- forward --------------------------------------
def gpt2_forward(tokens, params):
    """Equivalent of GPT2.forward(question): GPT2Model -> dropout(eval) -> Linear."""
    _, s = tokens.shape
    # TODO(synk): token/position embedding gather stays in plain JAX (data-dependent gather).
    x = params["wte"][tokens] + params["wpe"][jnp.arange(s)][None, :, :]
    x = run_blocks(x.astype(jnp.float32), params)
    return run_final(x, params["lnf_g"], params["lnf_b"], params["wp"], params["bp"])


# -------------------------------- main ----------------------------------------
if __name__ == "__main__":
    key = jax.random.PRNGKey(0)
    kp, kt = jax.random.split(key)
    params = init_params(kp)
    tokens = jax.random.randint(kt, (B, S), 0, VOCAB, dtype=jnp.int32)

    logits = gpt2_forward(tokens, params)
    jax.block_until_ready(logits)
    assert logits.shape == (B, S, VOCAB), logits.shape
    assert bool(jnp.all(jnp.isfinite(logits)))
    print("KERNEL_OK")
</pallas_src>

<mosaic_0001>
module attributes {stable_mosaic.version = 11 : i64} {
  func.func @gpt2_stack_kernel(%arg0: i32, %arg1: i32, %arg2: memref<1x8x64xf32, #tpu.memory_space<vmem>>, %arg3: memref<1x6x64xf32, #tpu.memory_space<vmem>>, %arg4: memref<1x1x192xf32, #tpu.memory_space<vmem>>, %arg5: memref<1x1x256xf32, #tpu.memory_space<vmem>>, %arg6: memref<1x64x192xbf16, #tpu.memory_space<vmem>>, %arg7: memref<1x64x64xbf16, #tpu.memory_space<vmem>>, %arg8: memref<1x64x256xbf16, #tpu.memory_space<vmem>>, %arg9: memref<1x256x64xbf16, #tpu.memory_space<vmem>>, %arg10: memref<1x8x64xf32, #tpu.memory_space<vmem>>, %arg11: memref<8x64xf32, #tpu.memory_space<vmem>>) attributes {dimension_semantics = [#tpu.dimension_semantics<parallel>, #tpu.dimension_semantics<arbitrary>], iteration_bounds = array<i64: 2, 2>, scalar_prefetch = 0 : i64, scratch_operands = 1 : i64, tpu.core_type = #tpu.core_type<tc>, window_params = [{transform_indices = @transform_0, window_bounds = array<i64: 1, 8, 64>}, {transform_indices = @transform_1, window_bounds = array<i64: 1, 6, 64>}, {transform_indices = @transform_2, window_bounds = array<i64: 1, 1, 192>}, {transform_indices = @transform_3, window_bounds = array<i64: 1, 1, 256>}, {transform_indices = @transform_4, window_bounds = array<i64: 1, 64, 192>}, {transform_indices = @transform_5, window_bounds = array<i64: 1, 64, 64>}, {transform_indices = @transform_6, window_bounds = array<i64: 1, 64, 256>}, {transform_indices = @transform_7, window_bounds = array<i64: 1, 256, 64>}, {transform_indices = @transform_8, window_bounds = array<i64: 1, 8, 64>}]} {
    %c0_i32 = arith.constant 0 : i32
    %0 = arith.cmpi eq, %arg1, %c0_i32 : i32
    %1 = arith.extui %0 : i1 to i32
    %c0_i32_0 = arith.constant 0 : i32
    %2 = arith.cmpi ne, %1, %c0_i32_0 : i32
    scf.if %2 {
      %c0_49 = arith.constant 0 : index
      %c0_50 = arith.constant 0 : index
      %c0_51 = arith.constant 0 : index
      %137 = vector.load %arg2[%c0_49, %c0_50, %c0_51] : memref<1x8x64xf32, #tpu.memory_space<vmem>>, vector<1x8x64xf32>
      %138 = vector.shape_cast %137 : vector<1x8x64xf32> to vector<8x64xf32>
      %c0_52 = arith.constant 0 : index
      %c0_53 = arith.constant 0 : index
      %139 = vector.load %arg11[%c0_52, %c0_53] : memref<8x64xf32, #tpu.memory_space<vmem>>, vector<8x64xf32>
      tpu.vector_store %arg11[%c0_52, %c0_53], %138 {strides = array<i32>} : memref<8x64xf32, #tpu.memory_space<vmem>>, vector<8x64xf32>,
    } else {
    }
    %c0 = arith.constant 0 : index
    %c0_1 = arith.constant 0 : index
    %3 = vector.load %arg11[%c0, %c0_1] : memref<8x64xf32, #tpu.memory_space<vmem>>, vector<8x64xf32>
    %c0_2 = arith.constant 0 : index
    %c0_3 = arith.constant 0 : index
    %c0_4 = arith.constant 0 : index
    %4 = vector.load %arg3[%c0_2, %c0_3, %c0_4] : memref<1x6x64xf32, #tpu.memory_space<vmem>>, vector<1x6x64xf32>
    %5 = vector.shape_cast %4 : vector<1x6x64xf32> to vector<6x64xf32>
    %6 = vector.extract_strided_slice %5 {offsets = [0, 0], sizes = [1, 64], strides = [1, 1]} : vector<6x64xf32> to vector<1x64xf32>
    %7 = vector.extract_strided_slice %5 {offsets = [1, 0], sizes = [1, 64], strides = [1, 1]} : vector<6x64xf32> to vector<1x64xf32>
    %8 = vector.extract_strided_slice %5 {offsets = [2, 0], sizes = [1, 64], strides = [1, 1]} : vector<6x64xf32> to vector<1x64xf32>
    %9 = vector.extract_strided_slice %5 {offsets = [3, 0], sizes = [1, 64], strides = [1, 1]} : vector<6x64xf32> to vector<1x64xf32>
    %10 = vector.extract_strided_slice %5 {offsets = [4, 0], sizes = [1, 64], strides = [1, 1]} : vector<6x64xf32> to vector<1x64xf32>
    %11 = vector.extract_strided_slice %5 {offsets = [5, 0], sizes = [1, 64], strides = [1, 1]} : vector<6x64xf32> to vector<1x64xf32>
    %cst = arith.constant dense<0.000000e+00> : vector<8xf32>
    %12 = vector.multi_reduction <add>, %3, %cst [1] : vector<8x64xf32> to vector<8xf32>
    %13 = vector.shape_cast %12 : vector<8xf32> to vector<8x1xf32>
    %cst_5 = arith.constant 6.400000e+01 : f32
    %14 = vector.broadcast %cst_5 : f32 to vector<8x1xf32>
    %15 = arith.divf %13, %14 : vector<8x1xf32>
    %16 = vector.broadcast %15 : vector<8x1xf32> to vector<8x64xf32>
    %17 = arith.subf %3, %16 : vector<8x64xf32>
    %18 = arith.mulf %17, %17 : vector<8x64xf32>
    %cst_6 = arith.constant dense<0.000000e+00> : vector<8xf32>
    %19 = vector.multi_reduction <add>, %18, %cst_6 [1] : vector<8x64xf32> to vector<8xf32>
    %20 = vector.shape_cast %19 : vector<8xf32> to vector<8x1xf32>
    %cst_7 = arith.constant 6.400000e+01 : f32
    %21 = vector.broadcast %cst_7 : f32 to vector<8x1xf32>
    %22 = arith.divf %20, %21 : vector<8x1xf32>
    %23 = vector.broadcast %15 : vector<8x1xf32> to vector<8x64xf32>
    %24 = arith.subf %3, %23 : vector<8x64xf32>
    %cst_8 = arith.constant 9.99999974E-6 : f32
    %25 = vector.broadcast %cst_8 : f32 to vector<8x1xf32>
    %26 = arith.addf %22, %25 : vector<8x1xf32>
    %27 = math.rsqrt %26 : vector<8x1xf32>
    %28 = vector.broadcast %27 : vector<8x1xf32> to vector<8x64xf32>
    %29 = arith.mulf %24, %28 : vector<8x64xf32>
    %30 = vector.broadcast %6 : vector<1x64xf32> to vector<8x64xf32>
    %31 = arith.mulf %29, %30 : vector<8x64xf32>
    %32 = vector.broadcast %7 : vector<1x64xf32> to vector<8x64xf32>
    %33 = arith.addf %31, %32 : vector<8x64xf32>
    %34 = arith.truncf %33 : vector<8x64xf32> to vector<8x64xbf16>
    %c0_9 = arith.constant 0 : index
    %c0_10 = arith.constant 0 : index
    %c0_11 = arith.constant 0 : index
    %35 = vector.load %arg6[%c0_9, %c0_10, %c0_11] : memref<1x64x192xbf16, #tpu.memory_space<vmem>>, vector<1x64x192xbf16>
    %36 = vector.shape_cast %35 : vector<1x64x192xbf16> to vector<64x192xbf16>
    %cst_12 = arith.constant dense<0.000000e+00> : vector<8x192xf32>
    %37 = tpu.matmul %34, %36, %cst_12 {dimension_numbers = #tpu.dot_dimension_numbers<[1], [0], [0], [1], [0, 0, 1, 1], [], []>} : vector<8x64xbf16>, vector<64x192xbf16>, vector<8x192xf32> -> vector<8x192xf32>
    %c0_13 = arith.constant 0 : index
    %c0_14 = arith.constant 0 : index
    %c0_15 = arith.constant 0 : index
    %38 = vector.load %arg4[%c0_13, %c0_14, %c0_15] : memref<1x1x192xf32, #tpu.memory_space<vmem>>, vector<1x1x192xf32>
    %39 = vector.shape_cast %38 : vector<1x1x192xf32> to vector<1x192xf32>
    %40 = vector.broadcast %39 : vector<1x192xf32> to vector<8x192xf32>
    %41 = arith.addf %37, %40 : vector<8x192xf32>
    %42 = arith.truncf %41 : vector<8x192xf32> to vector<8x192xbf16>
    %43 = vector.extract_strided_slice %42 {offsets = [0, 0], sizes = [8, 64], strides = [1, 1]} : vector<8x192xbf16> to vector<8x64xbf16>
    %44 = vector.shape_cast %43 : vector<8x64xbf16> to vector<8x4x16xbf16>
    %45 = tpu.transpose %44, [1, 0, 2] : vector<8x4x16xbf16> -> vector<4x8x16xbf16>
    %46 = vector.extract_strided_slice %42 {offsets = [0, 64], sizes = [8, 64], strides = [1, 1]} : vector<8x192xbf16> to vector<8x64xbf16>
    %47 = vector.shape_cast %46 : vector<8x64xbf16> to vector<8x4x16xbf16>
    %48 = tpu.transpose %47, [1, 0, 2] : vector<8x4x16xbf16> -> vector<4x8x16xbf16>
    %49 = vector.extract_strided_slice %42 {offsets = [0, 128], sizes = [8, 64], strides = [1, 1]} : vector<8x192xbf16> to vector<8x64xbf16>
    %50 = vector.shape_cast %49 : vector<8x64xbf16> to vector<8x4x16xbf16>
    %51 = tpu.transpose %50, [1, 0, 2] : vector<8x4x16xbf16> -> vector<4x8x16xbf16>
    "tpu.trace_start"() <{level = 10 : i32, message = "hqd,hkd->hqk"}> : () -> ()
    %cst_16 = arith.constant dense<0.000000e+00> : vector<4x8x8xf32>
    %52 = tpu.matmul %45, %48, %cst_16 {dimension_numbers = #tpu.dot_dimension_numbers<[2], [2], [1], [1], [0, 0, 0, 1, 1, 1], [0], [0]>} : vector<4x8x16xbf16>, vector<4x8x16xbf16>, vector<4x8x8xf32> -> vector<4x8x8xf32>
    "tpu.trace_stop"() : () -> ()
    %cst_17 = arith.constant 2.500000e-01 : f32
    %53 = vector.broadcast %cst_17 : f32 to vector<4x8x8xf32>
    %54 = arith.mulf %52, %53 : vector<4x8x8xf32>
    %55 = tpu.iota {dimensions = array<i32: 1>} : vector<1x8x8xi32>
    %56 = tpu.iota {dimensions = array<i32: 2>} : vector<1x8x8xi32>
    %57 = arith.cmpi sge, %55, %56 : vector<1x8x8xi32>
    %cst_18 = arith.constant -1.000000e+09 : f32
    %58 = vector.shape_cast %57 : vector<1x8x8xi1> to vector<1x8x8xi1>
    %59 = vector.broadcast %58 : vector<1x8x8xi1> to vector<4x8x8xi1>
    %60 = vector.broadcast %cst_18 : f32 to vector<4x8x8xf32>
    %61 = arith.select %59, %54, %60 : vector<4x8x8xi1>, vector<4x8x8xf32>
    %cst_19 = arith.constant dense<0xFF800000> : vector<4x8xf32>
    %62 = vector.multi_reduction <maximumf>, %61, %cst_19 [2] : vector<4x8x8xf32> to vector<4x8xf32>
    %63 = vector.shape_cast %62 : vector<4x8xf32> to vector<4x8x1xf32>
    %64 = vector.broadcast %63 : vector<4x8x1xf32> to vector<4x8x8xf32>
    %65 = arith.subf %61, %64 : vector<4x8x8xf32>
    %66 = math.exp %65 : vector<4x8x8xf32>
    %cst_20 = arith.constant dense<0.000000e+00> : vector<4x8xf32>
    %67 = vector.multi_reduction <add>, %66, %cst_20 [2] : vector<4x8x8xf32> to vector<4x8xf32>
    %68 = vector.shape_cast %67 : vector<4x8xf32> to vector<4x8x1xf32>
    %69 = tpu.reciprocal %68 {approx = true} : vector<4x8x1xf32> -> vector<4x8x1xf32>
    %70 = vector.broadcast %69 : vector<4x8x1xf32> to vector<4x8x8xf32>
    %71 = arith.mulf %66, %70 : vector<4x8x8xf32>
    %72 = arith.truncf %71 : vector<4x8x8xf32> to vector<4x8x8xbf16>
    "tpu.trace_start"() <{level = 10 : i32, message = "hqk,hkd->hqd"}> : () -> ()
    %cst_21 = arith.constant dense<0.000000e+00> : vector<4x8x16xf32>
    %73 = tpu.matmul %72, %51, %cst_21 {dimension_numbers = #tpu.dot_dimension_numbers<[2], [1], [1], [2], [0, 0, 0, 1, 1, 2], [0], [0]>} : vector<4x8x8xbf16>, vector<4x8x16xbf16>, vector<4x8x16xf32> -> vector<4x8x16xf32>
    "tpu.trace_stop"() : () -> ()
    %74 = tpu.transpose %73, [1, 0, 2] : vector<4x8x16xf32> -> vector<8x4x16xf32>
    %75 = vector.shape_cast %74 : vector<8x4x16xf32> to vector<8x64xf32>
    %76 = arith.truncf %75 : vector<8x64xf32> to vector<8x64xbf16>
    %c0_22 = arith.constant 0 : index
    %c0_23 = arith.constant 0 : index
    %c0_24 = arith.constant 0 : index
    %77 = vector.load %arg7[%c0_22, %c0_23, %c0_24] : memref<1x64x64xbf16, #tpu.memory_space<vmem>>, vector<1x64x64xbf16>
    %78 = vector.shape_cast %77 : vector<1x64x64xbf16> to vector<64x64xbf16>
    %cst_25 = arith.constant dense<0.000000e+00> : vector<8x64xf32>
    %79 = tpu.matmul %76, %78, %cst_25 {dimension_numbers = #tpu.dot_dimension_numbers<[1], [0], [0], [1], [0, 0, 1, 1], [], []>} : vector<8x64xbf16>, vector<64x64xbf16>, vector<8x64xf32> -> vector<8x64xf32>
    %80 = vector.broadcast %10 : vector<1x64xf32> to vector<8x64xf32>
    %81 = arith.addf %79, %80 : vector<8x64xf32>
    %82 = arith.addf %3, %81 : vector<8x64xf32>
    %cst_26 = arith.constant dense<0.000000e+00> : vector<8xf32>
    %83 = vector.multi_reduction <add>, %82, %cst_26 [1] : vector<8x64xf32> to vector<8xf32>
    %84 = vector.shape_cast %83 : vector<8xf32> to vector<8x1xf32>
    %cst_27 = arith.constant 6.400000e+01 : f32
    %85 = vector.broadcast %cst_27 : f32 to vector<8x1xf32>
    %86 = arith.divf %84, %85 : vector<8x1xf32>
    %87 = vector.broadcast %86 : vector<8x1xf32> to vector<8x64xf32>
    %88 = arith.subf %82, %87 : vector<8x64xf32>
    %89 = arith.mulf %88, %88 : vector<8x64xf32>
    %cst_28 = arith.constant dense<0.000000e+00> : vector<8xf32>
    %90 = vector.multi_reduction <add>, %89, %cst_28 [1] : vector<8x64xf32> to vector<8xf32>
    %91 = vector.shape_cast %90 : vector<8xf32> to vector<8x1xf32>
    %cst_29 = arith.constant 6.400000e+01 : f32
    %92 = vector.broadcast %cst_29 : f32 to vector<8x1xf32>
    %93 = arith.divf %91, %92 : vector<8x1xf32>
    %94 = vector.broadcast %86 : vector<8x1xf32> to vector<8x64xf32>
    %95 = arith.subf %82, %94 : vector<8x64xf32>
    %cst_30 = arith.constant 9.99999974E-6 : f32
    %96 = vector.broadcast %cst_30 : f32 to vector<8x1xf32>
    %97 = arith.addf %93, %96 : vector<8x1xf32>
    %98 = math.rsqrt %97 : vector<8x1xf32>
    %99 = vector.broadcast %98 : vector<8x1xf32> to vector<8x64xf32>
    %100 = arith.mulf %95, %99 : vector<8x64xf32>
    %101 = vector.broadcast %8 : vector<1x64xf32> to vector<8x64xf32>
    %102 = arith.mulf %100, %101 : vector<8x64xf32>
    %103 = vector.broadcast %9 : vector<1x64xf32> to vector<8x64xf32>
    %104 = arith.addf %102, %103 : vector<8x64xf32>
    %105 = arith.truncf %104 : vector<8x64xf32> to vector<8x64xbf16>
    %c0_31 = arith.constant 0 : index
    %c0_32 = arith.constant 0 : index
    %c0_33 = arith.constant 0 : index
    %106 = vector.load %arg8[%c0_31, %c0_32, %c0_33] : memref<1x64x256xbf16, #tpu.memory_space<vmem>>, vector<1x64x256xbf16>
    %107 = vector.shape_cast %106 : vector<1x64x256xbf16> to vector<64x256xbf16>
    %cst_34 = arith.constant dense<0.000000e+00> : vector<8x256xf32>
    %108 = tpu.matmul %105, %107, %cst_34 {dimension_numbers = #tpu.dot_dimension_numbers<[1], [0], [0], [1], [0, 0, 1, 1], [], []>} : vector<8x64xbf16>, vector<64x256xbf16>, vector<8x256xf32> -> vector<8x256xf32>
    %c0_35 = arith.constant 0 : index
    %c0_36 = arith.constant 0 : index
    %c0_37 = arith.constant 0 : index
    %109 = vector.load %arg5[%c0_35, %c0_36, %c0_37] : memref<1x1x256xf32, #tpu.memory_space<vmem>>, vector<1x1x256xf32>
    %110 = vector.shape_cast %109 : vector<1x1x256xf32> to vector<1x256xf32>
    %111 = vector.broadcast %110 : vector<1x256xf32> to vector<8x256xf32>
    %112 = arith.addf %108, %111 : vector<8x256xf32>
    %113 = arith.mulf %112, %112 : vector<8x256xf32>
    %114 = arith.mulf %112, %113 : vector<8x256xf32>
    %cst_38 = arith.constant 4.471500e-02 : f32
    %115 = vector.broadcast %cst_38 : f32 to vector<8x256xf32>
    %116 = arith.mulf %115, %114 : vector<8x256xf32>
    %117 = arith.addf %112, %116 : vector<8x256xf32>
    %cst_39 = arith.constant 0.797884583 : f32
    %118 = vector.broadcast %cst_39 : f32 to vector<8x256xf32>
    %119 = arith.mulf %118, %117 : vector<8x256xf32>
    %120 = math.tanh %119 : vector<8x256xf32>
    %cst_40 = arith.constant 1.000000e+00 : f32
    %121 = vector.broadcast %cst_40 : f32 to vector<8x256xf32>
    %122 = arith.addf %121, %120 : vector<8x256xf32>
    %cst_41 = arith.constant 5.000000e-01 : f32
    %123 = vector.broadcast %cst_41 : f32 to vector<8x256xf32>
    %124 = arith.mulf %123, %122 : vector<8x256xf32>
    %125 = arith.mulf %112, %124 : vector<8x256xf32>
    %126 = arith.truncf %125 : vector<8x256xf32> to vector<8x256xbf16>
    %c0_42 = arith.constant 0 : index
    %c0_43 = arith.constant 0 : index
    %c0_44 = arith.constant 0 : index
    %127 = vector.load %arg9[%c0_42, %c0_43, %c0_44] : memref<1x256x64xbf16, #tpu.memory_space<vmem>>, vector<1x256x64xbf16>
    %128 = vector.shape_cast %127 : vector<1x256x64xbf16> to vector<256x64xbf16>
    %cst_45 = arith.constant dense<0.000000e+00> : vector<8x64xf32>
    %129 = tpu.matmul %126, %128, %cst_45 {dimension_numbers = #tpu.dot_dimension_numbers<[1], [0], [0], [1], [0, 0, 1, 1], [], []>} : vector<8x256xbf16>, vector<256x64xbf16>, vector<8x64xf32> -> vector<8x64xf32>
    %130 = vector.broadcast %11 : vector<1x64xf32> to vector<8x64xf32>
    %131 = arith.addf %129, %130 : vector<8x64xf32>
    %132 = arith.addf %82, %131 : vector<8x64xf32>
    %c0_46 = arith.constant 0 : index
    %c0_47 = arith.constant 0 : index
    %133 = vector.load %arg11[%c0_46, %c0_47] : memref<8x64xf32, #tpu.memory_space<vmem>>, vector<8x64xf32>
    tpu.vector_store %arg11[%c0_46, %c0_47], %132 {strides = array<i32>} : memref<8x64xf32, #tpu.memory_space<vmem>>, vector<8x64xf32>,
    %c1_i32 = arith.constant 1 : i32
    %134 = arith.cmpi eq, %arg1, %c1_i32 : i32
    %135 = arith.extui %134 : i1 to i32
    %c0_i32_48 = arith.constant 0 : i32
    %136 = arith.cmpi ne, %135, %c0_i32_48 : i32
    scf.if %136 {
      %c0_49 = arith.constant 0 : index
      %c0_50 = arith.constant 0 : index
      %c0_51 = arith.constant 0 : index
      %137 = vector.load %arg10[%c0_49, %c0_50, %c0_51] : memref<1x8x64xf32, #tpu.memory_space<vmem>>, vector<1x8x64xf32>
      %138 = vector.shape_cast %137 : vector<1x8x64xf32> to vector<8x64xf32>
      %139 = vector.shape_cast %132 : vector<8x64xf32> to vector<1x8x64xf32>
      tpu.vector_store %arg10[%c0_49, %c0_50, %c0_51], %139 {strides = array<i32>} : memref<1x8x64xf32, #tpu.memory_space<vmem>>, vector<1x8x64xf32>,
    } else {
    }
    return
  }
  func.func @transform_0(%arg0: i32, %arg1: i32) -> (i32, i32, i32) {
    %c0_i32 = arith.constant 0 : i32
    %c0_i32_0 = arith.constant 0 : i32
    %c0_i32_1 = arith.constant 0 : i32
    return %arg0, %c0_i32, %c0_i32_0 : i32, i32, i32
  }
  func.func @transform_1(%arg0: i32, %arg1: i32) -> (i32, i32, i32) {
    %c0_i32 = arith.constant 0 : i32
    %c0_i32_0 = arith.constant 0 : i32
    %c0_i32_1 = arith.constant 0 : i32
    return %arg1, %c0_i32, %c0_i32_0 : i32, i32, i32
  }
  func.func @transform_2(%arg0: i32, %arg1: i32) -> (i32, i32, i32) {
    %c0_i32 = arith.constant 0 : i32
    %c0_i32_0 = arith.constant 0 : i32
    %c0_i32_1 = arith.constant 0 : i32
    return %arg1, %c0_i32, %c0_i32_0 : i32, i32, i32
  }
  func.func @transform_3(%arg0: i32, %arg1: i32) -> (i32, i32, i32) {
    %c0_i32 = arith.constant 0 : i32
    %c0_i32_0 = arith.constant 0 : i32
    %c0_i32_1 = arith.constant 0 : i32
    return %arg1, %c0_i32, %c0_i32_0 : i32, i32, i32
  }
  func.func @transform_4(%arg0: i32, %arg1: i32) -> (i32, i32, i32) {
    %c0_i32 = arith.constant 0 : i32
    %c0_i32_0 = arith.constant 0 : i32
    %c0_i32_1 = arith.constant 0 : i32
    return %arg1, %c0_i32, %c0_i32_0 : i32, i32, i32
  }
  func.func @transform_5(%arg0: i32, %arg1: i32) -> (i32, i32, i32) {
    %c0_i32 = arith.constant 0 : i32
    %c0_i32_0 = arith.constant 0 : i32
    %c0_i32_1 = arith.constant 0 : i32
    return %arg1, %c0_i32, %c0_i32_0 : i32, i32, i32
  }
  func.func @transform_6(%arg0: i32, %arg1: i32) -> (i32, i32, i32) {
    %c0_i32 = arith.constant 0 : i32
    %c0_i32_0 = arith.constant 0 : i32
    %c0_i32_1 = arith.constant 0 : i32
    return %arg1, %c0_i32, %c0_i32_0 : i32, i32, i32
  }
  func.func @transform_7(%arg0: i32, %arg1: i32) -> (i32, i32, i32) {
    %c0_i32 = arith.constant 0 : i32
    %c0_i32_0 = arith.constant 0 : i32
    %c0_i32_1 = arith.constant 0 : i32
    return %arg1, %c0_i32, %c0_i32_0 : i32, i32, i32
  }
  func.func @transform_8(%arg0: i32, %arg1: i32) -> (i32, i32, i32) {
    %c0_i32 = arith.constant 0 : i32
    %c0_i32_0 = arith.constant 0 : i32
    %c0_i32_1 = arith.constant 0 : i32
    return %arg0, %c0_i32, %c0_i32_0 : i32, i32, i32
  }
}

</mosaic_0001>

<llo_original>
// kernel: tpu_custom_call.1
$region0: #{tpu_custom_call.1}
  #allocation0 [shape = 'u32[]', space=smem, size = 0x4, offset = 0x4, fixed_abs, tag = 'smem constant byte address 0x4 - core index']
  #allocation1 [shape = 'u32[144,128]{1,0:T(1,128)}', space=vmem, size = 0x12000, scoped, tag = 'internal scratch']
  #allocation2 [shape = 'f32[8,64]{1,0:T(8,128)}', space=vmem, size = 0x1000, scoped, tag = 'scratch operand']
  %s0 = inlined_call_operand.vmem [shape: f32[2,8,64], index: 0, kind: input, shape index: {}]
  %s1 = inlined_call_operand.vmem [shape: f32[2,6,64], index: 1, kind: input, shape index: {}]
  %s2 = inlined_call_operand.vmem [shape: f32[2,1,192], index: 2, kind: input, shape index: {}]
  %s3 = inlined_call_operand.vmem [shape: f32[2,1,256], index: 3, kind: input, shape index: {}]
  %s4 = inlined_call_operand.vmem [shape: bf16[2,64,192], index: 4, kind: input, shape index: {}]
  %s5 = inlined_call_operand.vmem [shape: bf16[2,64,64], index: 5, kind: input, shape index: {}]
  %s6 = inlined_call_operand.vmem [shape: bf16[2,64,256], index: 6, kind: input, shape index: {}]
  %s7 = inlined_call_operand.vmem [shape: bf16[2,256,64], index: 7, kind: input, shape index: {}]
  %s8 = inlined_call_operand.hbm [shape: f32[2,8,64], index: 8, kind: output, shape index: {}]
  %s9 = sld [smem:[#allocation0]]
  $region73: #{tpu_custom_call.1} parent=0
    _
  %s11 = ssub.s32 1, %s9
  %s12 = scalar_select 0, %s11, %s9
  $region1: #{tpu_custom_call.1} parent=0
    #allocation3 [shape = 'u8[8192]{0}', space=vmem, size = 0x2000, scoped, tag = 'output window, operand 0']
    #allocation4 [shape = 's32[2]{0}', space=sflag, size = 0x8, scoped, tag = 'scoped memory for tpu_custom_call.1']
    %13 = vsyncpa [#allocation4], 0
    %s14 = scalar_lea.sflag [#allocation4], 1
    %15 = vsyncpa %s14, 0
    loop: start=0, step=1, limit=6
    $region2: #{tpu_custom_call.1} parent=1 // loop_pre_header
      _
    $region3: #{tpu_custom_call.1} parent=1 // loop_header
      %s17 = sphi 0, %s21
      %p18 = scmp.ge.s32.totalorder %s17, 6
      %s24 = sphi 0, %s36
      %s25 = sphi 0, %s32
      %s26 = sphi 0, %s24
      %s27 = sphi 0, %s25
      %s28 = sphi 0, %s26
      %s29 = sphi 0, %s27
      %s39 = sphi 0, %s41
      %s42 = sphi 0, %s39
      %s43 = sphi 0, %s42
      %s59 = sphi 0, %s43
      %s65 = sphi 0, %s67
      %s68 = sphi 0, %s65
      %s69 = sphi 0, %s68
      %s85 = sphi 0, %s69
      %s91 = sphi 0, %s93
      %s94 = sphi 0, %s91
      %s95 = sphi 0, %s94
      %s111 = sphi 0, %s95
      %s117 = sphi 0, %s119
      %s120 = sphi 0, %s117
      %s121 = sphi 0, %s120
      %s137 = sphi 0, %s121
      %s143 = sphi 0, %s145
      %s146 = sphi 0, %s143
      %s147 = sphi 0, %s146
      %s163 = sphi 0, %s147
      %s169 = sphi 0, %s171
      %s172 = sphi 0, %s169
      %s173 = sphi 0, %s172
      %s189 = sphi 0, %s173
      %s195 = sphi 0, %s197
      %s198 = sphi 0, %s195
      %s199 = sphi 0, %s198
      %s215 = sphi 0, %s199
      %s221 = sphi 0, %s223
      %s224 = sphi 0, %s221
      %s225 = sphi 0, %s224
      %s241 = sphi 0, %s225
      %s247 = sphi 0, %s249
      %s250 = sphi 0, %s247
      %s251 = sphi 0, %s250
      %s267 = sphi 0, %s251
    $region4: #{tpu_custom_call.1} parent=1 // loop_header_branch
      %20 = sbr.rel (%p18) target = $region8
    $region5: #{tpu_custom_call.1} parent=1 // loop_body
      %s22 = ssub.s32 %s17, 1
      %s23 = ssub.s32 %s17, 2
      %s30 = sadd.s32 1, %s25
      %p31 = scmp.ge.s32.totalorder %s30, 2
      %s32 = scalar_select %p31, 0, %s30
      %s33 = sadd.s32 1, %s24
      %s34 = scalar_select %p31, %s33, %s24
      %p35 = scmp.ge.s32.totalorder %s34, 2
      %s36 = scalar_select %p35, 0, %s34
      %s37 = ssub.s32 %s24, %s36
      %p38 = scmp.eq.s32.totalorder %s37, 0
      %s40 = sadd.s32 %s39, 1
      %s41 = scalar_select %p38, %s39, %s40
      %p44 = pneg %p38
      %p45 = scmp.eq.s32.totalorder %s17, 3
      %p46 = por %p44, %p45
      %p47 = scmp.ne.s32.totalorder %s39, %s42
      %p48 = scmp.eq.s32.totalorder %s17, 0
      %p49 = por %p47, %p48
      %p50 = scmp.ne.s32.totalorder %s39, %s42
      %p51 = scmp.eq.s32.totalorder %s22, 3
      %p52 = por %p50, %p51
      %p53 = scmp.ne.s32.totalorder %s42, %s43
      %p54 = scmp.eq.s32.totalorder %s22, 0
      %p55 = por %p53, %p54
      %p56 = scmp.ne.s32.totalorder %s42, %s43
      %p57 = scmp.eq.s32.totalorder %s23, 3
      %p58 = por %p56, %p57
      %p60 = scmp.ne.s32.totalorder %s43, %s59
      %p61 = scmp.eq.s32.totalorder %s23, 0
      %p62 = por %p60, %p61
      %s63 = ssub.s32 %s25, %s32
      %p64 = scmp.eq.s32.totalorder %s63, 0
      %s66 = sadd.s32 %s65, 1
      %s67 = scalar_select %p64, %s65, %s66
      %p70 = pneg %p64
      %p71 = scmp.eq.s32.totalorder %s17, 3
      %p72 = por %p70, %p71
      %p73 = scmp.ne.s32.totalorder %s65, %s68
      %p74 = scmp.eq.s32.totalorder %s17, 0
      %p75 = por %p73, %p74
      %p76 = scmp.ne.s32.totalorder %s65, %s68
      %p77 = scmp.eq.s32.totalorder %s22, 3
      %p78 = por %p76, %p77
      %p79 = scmp.ne.s32.totalorder %s68, %s69
      %p80 = scmp.eq.s32.totalorder %s22, 0
      %p81 = por %p79, %p80
      %p82 = scmp.ne.s32.totalorder %s68, %s69
      %p83 = scmp.eq.s32.totalorder %s23, 3
      %p84 = por %p82, %p83
      %p86 = scmp.ne.s32.totalorder %s69, %s85
      %p87 = scmp.eq.s32.totalorder %s23, 0
      %p88 = por %p86, %p87
      %s89 = ssub.s32 %s25, %s32
      %p90 = scmp.eq.s32.totalorder %s89, 0
      %s92 = sadd.s32 %s91, 1
      %s93 = scalar_select %p90, %s91, %s92
      %p96 = pneg %p90
      %p97 = scmp.eq.s32.totalorder %s17, 3
      %p98 = por %p96, %p97
      %p99 = scmp.ne.s32.totalorder %s91, %s94
      %p100 = scmp.eq.s32.totalorder %s17, 0
      %p101 = por %p99, %p100
      %p102 = scmp.ne.s32.totalorder %s91, %s94
      %p103 = scmp.eq.s32.totalorder %s22, 3
      %p104 = por %p102, %p103
      %p105 = scmp.ne.s32.totalorder %s94, %s95
      %p106 = scmp.eq.s32.totalorder %s22, 0
      %p107 = por %p105, %p106
      %p108 = scmp.ne.s32.totalorder %s94, %s95
      %p109 = scmp.eq.s32.totalorder %s23, 3
      %p110 = por %p108, %p109
      %p112 = scmp.ne.s32.totalorder %s95, %s111
      %p113 = scmp.eq.s32.totalorder %s23, 0
      %p114 = por %p112, %p113
      %s115 = ssub.s32 %s25, %s32
      %p116 = scmp.eq.s32.totalorder %s115, 0
      %s118 = sadd.s32 %s117, 1
      %s119 = scalar_select %p116, %s117, %s118
      %p122 = pneg %p116
      %p123 = scmp.eq.s32.totalorder %s17, 3
      %p124 = por %p122, %p123
      %p125 = scmp.ne.s32.totalorder %s117, %s120
      %p126 = scmp.eq.s32.totalorder %s17, 0
      %p127 = por %p125, %p126
      %p128 = scmp.ne.s32.totalorder %s117, %s120
      %p129 = scmp.eq.s32.totalorder %s22, 3
      %p130 = por %p128, %p129
      %p131 = scmp.ne.s32.totalorder %s120, %s121
      %p132 = scmp.eq.s32.totalorder %s22, 0
      %p133 = por %p131, %p132
      %p134 = scmp.ne.s32.totalorder %s120, %s121
      %p135 = scmp.eq.s32.totalorder %s23, 3
      %p136 = por %p134, %p135
      %p138 = scmp.ne.s32.totalorder %s121, %s137
      %p139 = scmp.eq.s32.totalorder %s23, 0
      %p140 = por %p138, %p139
      %s141 = ssub.s32 %s25, %s32
      %p142 = scmp.eq.s32.totalorder %s141, 0
      %s144 = sadd.s32 %s143, 1
      %s145 = scalar_select %p142, %s143, %s144
      %p148 = pneg %p142
      %p149 = scmp.eq.s32.totalorder %s17, 3
      %p150 = por %p148, %p149
      %p151 = scmp.ne.s32.totalorder %s143, %s146
      %p152 = scmp.eq.s32.totalorder %s17, 0
      %p153 = por %p151, %p152
      %p154 = scmp.ne.s32.totalorder %s143, %s146
      %p155 = scmp.eq.s32.totalorder %s22, 3
      %p156 = por %p154, %p155
      %p157 = scmp.ne.s32.totalorder %s146, %s147
      %p158 = scmp.eq.s32.totalorder %s22, 0
      %p159 = por %p157, %p158
      %p160 = scmp.ne.s32.totalorder %s146, %s147
      %p161 = scmp.eq.s32.totalorder %s23, 3
      %p162 = por %p160, %p161
      %p164 = scmp.ne.s32.totalorder %s147, %s163
      %p165 = scmp.eq.s32.totalorder %s23, 0
      %p166 = por %p164, %p165
      %s167 = ssub.s32 %s25, %s32
      %p168 = scmp.eq.s32.totalorder %s167, 0
      %s170 = sadd.s32 %s169, 1
      %s171 = scalar_select %p168, %s169, %s170
      %p174 = pneg %p168
      %p175 = scmp.eq.s32.totalorder %s17, 3
      %p176 = por %p174, %p175
      %p177 = scmp.ne.s32.totalorder %s169, %s172
      %p178 = scmp.eq.s32.totalorder %s17, 0
      %p179 = por %p177, %p178
      %p180 = scmp.ne.s32.totalorder %s169, %s172
      %p181 = scmp.eq.s32.totalorder %s22, 3
      %p182 = por %p180, %p181
      %p183 = scmp.ne.s32.totalorder %s172, %s173
      %p184 = scmp.eq.s32.totalorder %s22, 0
      %p185 = por %p183, %p184
      %p186 = scmp.ne.s32.totalorder %s172, %s173
      %p187 = scmp.eq.s32.totalorder %s23, 3
      %p188 = por %p186, %p187
      %p190 = scmp.ne.s32.totalorder %s173, %s189
      %p191 = scmp.eq.s32.totalorder %s23, 0
      %p192 = por %p190, %p191
      %s193 = ssub.s32 %s25, %s32
      %p194 = scmp.eq.s32.totalorder %s193, 0
      %s196 = sadd.s32 %s195, 1
      %s197 = scalar_select %p194, %s195, %s196
      %p200 = pneg %p194
      %p201 = scmp.eq.s32.totalorder %s17, 3
      %p202 = por %p200, %p201
      %p203 = scmp.ne.s32.totalorder %s195, %s198
      %p204 = scmp.eq.s32.totalorder %s17, 0
      %p205 = por %p203, %p204
      %p206 = scmp.ne.s32.totalorder %s195, %s198
      %p207 = scmp.eq.s32.totalorder %s22, 3
      %p208 = por %p206, %p207
      %p209 = scmp.ne.s32.totalorder %s198, %s199
      %p210 = scmp.eq.s32.totalorder %s22, 0
      %p211 = por %p209, %p210
      %p212 = scmp.ne.s32.totalorder %s198, %s199
      %p213 = scmp.eq.s32.totalorder %s23, 3
      %p214 = por %p212, %p213
      %p216 = scmp.ne.s32.totalorder %s199, %s215
      %p217 = scmp.eq.s32.totalorder %s23, 0
      %p218 = por %p216, %p217
      %s219 = ssub.s32 %s25, %s32
      %p220 = scmp.eq.s32.totalorder %s219, 0
      %s222 = sadd.s32 %s221, 1
      %s223 = scalar_select %p220, %s221, %s222
      %p226 = pneg %p220
      %p227 = scmp.eq.s32.totalorder %s17, 3
      %p228 = por %p226, %p227
      %p229 = scmp.ne.s32.totalorder %s221, %s224
      %p230 = scmp.eq.s32.totalorder %s17, 0
      %p231 = por %p229, %p230
      %p232 = scmp.ne.s32.totalorder %s221, %s224
      %p233 = scmp.eq.s32.totalorder %s22, 3
      %p234 = por %p232, %p233
      %p235 = scmp.ne.s32.totalorder %s224, %s225
      %p236 = scmp.eq.s32.totalorder %s22, 0
      %p237 = por %p235, %p236
      %p238 = scmp.ne.s32.totalorder %s224, %s225
      %p239 = scmp.eq.s32.totalorder %s23, 3
      %p240 = por %p238, %p239
      %p242 = scmp.ne.s32.totalorder %s225, %s241
      %p243 = scmp.eq.s32.totalorder %s23, 0
      %p244 = por %p242, %p243
      %s245 = ssub.s32 %s24, %s36
      %p246 = scmp.eq.s32.totalorder %s245, 0
      %s248 = sadd.s32 %s247, 1
      %s249 = scalar_select %p246, %s247, %s248
      %p252 = pneg %p246
      %p253 = scmp.eq.s32.totalorder %s17, 3
      %p254 = por %p252, %p253
      %p255 = scmp.ne.s32.totalorder %s247, %s250
      %p256 = scmp.eq.s32.totalorder %s17, 0
      %p257 = por %p255, %p256
      %p258 = scmp.ne.s32.totalorder %s247, %s250
      %p259 = scmp.eq.s32.totalorder %s22, 3
      %p260 = por %p258, %p259
      %p261 = scmp.ne.s32.totalorder %s250, %s251
      %p262 = scmp.eq.s32.totalorder %s22, 0
      %p263 = por %p261, %p262
      %p264 = scmp.ne.s32.totalorder %s250, %s251
      %p265 = scmp.eq.s32.totalorder %s23, 3
      %p266 = por %p264, %p265
      %p268 = scmp.ne.s32.totalorder %s251, %s267
      %p269 = scmp.eq.s32.totalorder %s23, 0
      %p270 = por %p268, %p269
      %p271 = scmp.le.s32.totalorder 1, %s17
      %p272 = scmp.lt.s32.totalorder %s17, 5
      %p273 = pnand %p271, %p272
      %p274 = pneg %p273
      // Predicated region
      $region9: #{tpu_custom_call.1} parent=5 // pred_check
        _
      $region10: #{tpu_custom_call.1} parent=5 // pred_check_branch
        %276 = sbr.rel (%p273) target = $region12
      $region11: #{tpu_custom_call.1} parent=5 // pred_region
        %s277 = ssub.s32 %s17, 1
      $region12: #{tpu_custom_call.1} parent=5 // pred_fallthru
        _
      %p278 = scmp.lt.s32.totalorder %s17, 4
      // Predicated region
      $region13: #{tpu_custom_call.1} parent=5 // pred_check
        %p279 = pneg %p278
      $region14: #{tpu_custom_call.1} parent=5 // pred_check_branch
        %281 = sbr.rel (%p279) target = $region16
      $region15: #{tpu_custom_call.1} parent=5 // pred_region
        // Predicated region
        $region17: #{tpu_custom_call.1} parent=15 // pred_check
          %p282 = pneg %p49
        $region18: #{tpu_custom_call.1} parent=15 // pred_check_branch
          %284 = sbr.rel (%p282) target = $region20
        $region19: #{tpu_custom_call.1} parent=15 // pred_region
          %p285 = scmp.lt.s32.totalorder %s24, 1
          %s286 = scalar_select %p285, %s24, 1
          %s287 = smul.addr %s286, 8
          %s288 = scalar_lea.vmem %s0, %s287
        $region20: #{tpu_custom_call.1} parent=15 // pred_fallthru
          _
        // Predicated region
        $region21: #{tpu_custom_call.1} parent=15 // pred_check
          %p289 = pneg %p75
        $region22: #{tpu_custom_call.1} parent=15 // pred_check_branch
          %291 = sbr.rel (%p289) target = $region24
        $region23: #{tpu_custom_call.1} parent=15 // pred_region
          %p292 = scmp.lt.s32.totalorder %s25, 1
          %s293 = scalar_select %p292, %s25, 1
          %s294 = smul.addr %s293, 8
          %s295 = scalar_lea.vmem %s1, %s294
        $region24: #{tpu_custom_call.1} parent=15 // pred_fallthru
          _
        // Predicated region
        $region25: #{tpu_custom_call.1} parent=15 // pred_check
          %p296 = pneg %p101
        $region26: #{tpu_custom_call.1} parent=15 // pred_check_branch
          %298 = sbr.rel (%p296) target = $region28
        $region27: #{tpu_custom_call.1} parent=15 // pred_region
          %p299 = scmp.lt.s32.totalorder %s25, 1
          %s300 = scalar_select %p299, %s25, 1
          %s301 = smul.addr %s300, 2
          %s302 = scalar_lea.vmem %s2, %s301
        $region28: #{tpu_custom_call.1} parent=15 // pred_fallthru
          _
        // Predicated region
        $region29: #{tpu_custom_call.1} parent=15 // pred_check
          %p303 = pneg %p127
        $region30: #{tpu_custom_call.1} parent=15 // pred_check_branch
          %305 = sbr.rel (%p303) target = $region32
        $region31: #{tpu_custom_call.1} parent=15 // pred_region
          %p306 = scmp.lt.s32.totalorder %s25, 1
          %s307 = scalar_select %p306, %s25, 1
          %s308 = smul.addr %s307, 2
          %s309 = scalar_lea.vmem %s3, %s308
        $region32: #{tpu_custom_call.1} parent=15 // pred_fallthru
          _
        // Predicated region
        $region33: #{tpu_custom_call.1} parent=15 // pred_check
          %p310 = pneg %p153
        $region34: #{tpu_custom_call.1} parent=15 // pred_check_branch
          %312 = sbr.rel (%p310) target = $region36
        $region35: #{tpu_custom_call.1} parent=15 // pred_region
          %p313 = scmp.lt.s32.totalorder %s25, 1
          %s314 = scalar_select %p313, %s25, 1
          %s315 = smul.addr %s314, 16
          %s316 = smul.addr %s315, 4
          %s317 = scalar_lea.vmem %s4, %s316
        $region36: #{tpu_custom_call.1} parent=15 // pred_fallthru
          _
        // Predicated region
        $region37: #{tpu_custom_call.1} parent=15 // pred_check
          %p318 = pneg %p179
        $region38: #{tpu_custom_call.1} parent=15 // pred_check_branch
          %320 = sbr.rel (%p318) target = $region40
        $region39: #{tpu_custom_call.1} parent=15 // pred_region
          %p321 = scmp.lt.s32.totalorder %s25, 1
          %s322 = scalar_select %p321, %s25, 1
          %s323 = smul.addr %s322, 8
          %s324 = smul.addr %s323, 4
          %s325 = scalar_lea.vmem %s5, %s324
        $region40: #{tpu_custom_call.1} parent=15 // pred_fallthru
          _
        // Predicated region
        $region41: #{tpu_custom_call.1} parent=15 // pred_check
          %p326 = pneg %p205
        $region42: #{tpu_custom_call.1} parent=15 // pred_check_branch
          %328 = sbr.rel (%p326) target = $region44
        $region43: #{tpu_custom_call.1} parent=15 // pred_region
          %p329 = scmp.lt.s32.totalorder %s25, 1
          %s330 = scalar_select %p329, %s25, 1
          %s331 = smul.addr %s330, 16
          %s332 = smul.addr %s331, 4
          %s333 = scalar_lea.vmem %s6, %s332
        $region44: #{tpu_custom_call.1} parent=15 // pred_fallthru
          _
        // Predicated region
        $region45: #{tpu_custom_call.1} parent=15 // pred_check
          %p334 = pneg %p231
        $region46: #{tpu_custom_call.1} parent=15 // pred_check_branch
          %336 = sbr.rel (%p334) target = $region48
        $region47: #{tpu_custom_call.1} parent=15 // pred_region
          %p337 = scmp.lt.s32.totalorder %s25, 1
          %s338 = scalar_select %p337, %s25, 1
          %s339 = smul.addr %s338, 32
          %s340 = smul.addr %s339, 4
          %s341 = scalar_lea.vmem %s7, %s340
        $region48: #{tpu_custom_call.1} parent=15 // pred_fallthru
          _
      $region16: #{tpu_custom_call.1} parent=5 // pred_fallthru
        _
      %p342 = scmp.le.s32.totalorder 1, %s17
      %p343 = scmp.lt.s32.totalorder %s17, 5
      %p344 = pnand %p342, %p343
      %p345 = pneg %p344
      // Predicated region
      $region49: #{tpu_custom_call.1} parent=5 // pred_check
        _
      $region50: #{tpu_custom_call.1} parent=5 // pred_check_branch
        %347 = sbr.rel (%p344) target = $region52
      $region51: #{tpu_custom_call.1} parent=5 // pred_region
        %s348 = ssub.s32 %s17, 1
        %p349 = scmp.lt.s32.totalorder %s26, 1
        %s350 = scalar_select %p349, %s26, 1
        %s351 = smul.addr %s350, 8
        %s352 = scalar_lea.vmem %s0, %s351
        %p353 = pneg %p55
        %p354 = pneg %p52
        %p355 = scmp.lt.s32.totalorder %s27, 1
        %s356 = scalar_select %p355, %s27, 1
        %s357 = smul.addr %s356, 8
        %s358 = scalar_lea.vmem %s1, %s357
        %p359 = pneg %p81
        %p360 = pneg %p78
        %p361 = scmp.lt.s32.totalorder %s27, 1
        %s362 = scalar_select %p361, %s27, 1
        %s363 = smul.addr %s362, 2
        %s364 = scalar_lea.vmem %s2, %s363
        %p365 = pneg %p107
        %p366 = pneg %p104
        %p367 = scmp.lt.s32.totalorder %s27, 1
        %s368 = scalar_select %p367, %s27, 1
        %s369 = smul.addr %s368, 2
        %s370 = scalar_lea.vmem %s3, %s369
        %p371 = pneg %p133
        %p372 = pneg %p130
        %p373 = scmp.lt.s32.totalorder %s27, 1
        %s374 = scalar_select %p373, %s27, 1
        %s375 = smul.addr %s374, 16
        %s376 = smul.addr %s375, 4
        %s377 = scalar_lea.vmem %s4, %s376
        %p378 = pneg %p159
        %p379 = pneg %p156
        %p380 = scmp.lt.s32.totalorder %s27, 1
        %s381 = scalar_select %p380, %s27, 1
        %s382 = smul.addr %s381, 8
        %s383 = smul.addr %s382, 4
        %s384 = scalar_lea.vmem %s5, %s383
        %p385 = pneg %p185
        %p386 = pneg %p182
        %p387 = scmp.lt.s32.totalorder %s27, 1
        %s388 = scalar_select %p387, %s27, 1
        %s389 = smul.addr %s388, 16
        %s390 = smul.addr %s389, 4
        %s391 = scalar_lea.vmem %s6, %s390
        %p392 = pneg %p211
        %p393 = pneg %p208
        %p394 = scmp.lt.s32.totalorder %s27, 1
        %s395 = scalar_select %p394, %s27, 1
        %s396 = smul.addr %s395, 32
        %s397 = smul.addr %s396, 4
        %s398 = scalar_lea.vmem %s7, %s397
        %p399 = pneg %p237
        %p400 = pneg %p234
        %p401 = pneg %p263
        %p402 = pneg %p260
        %s403 = sand.u32 %s250, 1
        %s404 = scalar_lea.sflag [#allocation4], %s403
        %s405 = sand.u32 %s250, 1
        %s406 = smul.addr %s405, 8
        %s407 = scalar_lea.vmem [#allocation3], %s406
        %p408 = scmp.lt.s32.totalorder %s26, 1
        %s409 = scalar_select %p408, %s26, 1
        %s410 = smul.addr %s409, 8
        %s411 = scalar_lea.vmem %s0, %s410
        %p412 = scmp.lt.s32.totalorder %s27, 1
        %s413 = scalar_select %p412, %s27, 1
        %s414 = smul.addr %s413, 8
        %s415 = scalar_lea.vmem %s1, %s414
        %p416 = scmp.lt.s32.totalorder %s27, 1
        %s417 = scalar_select %p416, %s27, 1
        %s418 = smul.addr %s417, 2
        %s419 = scalar_lea.vmem %s2, %s418
        %p420 = scmp.lt.s32.totalorder %s27, 1
        %s421 = scalar_select %p420, %s27, 1
        %s422 = smul.addr %s421, 2
        %s423 = scalar_lea.vmem %s3, %s422
        %p424 = scmp.lt.s32.totalorder %s27, 1
        %s425 = scalar_select %p424, %s27, 1
        %s426 = smul.addr %s425, 16
        %s427 = smul.addr %s426, 4
        %s428 = scalar_lea.vmem %s4, %s427
        %p429 = scmp.lt.s32.totalorder %s27, 1
        %s430 = scalar_select %p429, %s27, 1
        %s431 = smul.addr %s430, 8
        %s432 = smul.addr %s431, 4
        %s433 = scalar_lea.vmem %s5, %s432
        %p434 = scmp.lt.s32.totalorder %s27, 1
        %s435 = scalar_select %p434, %s27, 1
        %s436 = smul.addr %s435, 16
        %s437 = smul.addr %s436, 4
        %s438 = scalar_lea.vmem %s6, %s437
        %p439 = scmp.lt.s32.totalorder %s27, 1
        %s440 = scalar_select %p439, %s27, 1
        %s441 = smul.addr %s440, 32
        %s442 = smul.addr %s441, 4
        %s443 = scalar_lea.vmem %s7, %s442
        %p445 = scmp.eq.s32.totalorder %s27, 0
        // Predicated region
        $region53: #{tpu_custom_call.1} parent=51 // pred_check
          %p446 = pneg %p445
        $region54: #{tpu_custom_call.1} parent=51 // pred_check_branch
          %448 = sbr.rel (%p446) target = $region56
        $region55: #{tpu_custom_call.1} parent=51 // pred_region
          %v449 = vld [vmem:[%s411] sm:$0xff]
          %vm450 = vcmask 523264
          %451 = vst.msk [vmem:[#allocation2] sm:$0xff] %vm450, %v449
        $region56: #{tpu_custom_call.1} parent=51 // pred_fallthru
          _
        %v452 = vld [vmem:[#allocation2] sm:$0xff]
        %v453 = vld [vmem:[%s415] sm:$0x3f]
        %vm454 = vcmask 523264
        %v455 = vsel %vm454, %v452, 0.0
        %456 = vadd.xlane.f32.xlu0 %v455
        %v457 = vpop.xlane.xlu0 %456
        %v458 = vrcp.pop 64.0
        %v459 = vmul.f32 %v457, %v458
        %v460 = vsub.f32 %v452, %v459
        %v461 = vmul.f32 %v460, %v460
        %v462 = vsel %vm454, %v461, 0.0
        %463 = vadd.xlane.f32.xlu0 %v462
        %v464 = vpop.xlane.xlu0 %463
        %v465 = vmul.f32 %v464, %v458
        %v466 = vadd.f32 %v465, 1e-05
        %v467 = vrsqrt.pop %v466
        %v468 = vmul.f32 %v460, %v467
        %v469 = vlaneseq
        %v470 = vshrl.u32 %v469, 7
        %v471 = vsub.s32 0, %v470
        %v472 = vrot.slane %v453, %v471
        %v473 = vmul.f32 %v468, %v472
        %v474 = vlaneseq
        %v475 = vshrl.u32 %v474, 7
        %v476 = vsub.s32 1, %v475
        %v477 = vrot.slane %v453, %v476
        %v478 = vadd.f32 %v473, %v477
        %v479 = vpack.c.bf16 %v478, %v478
        %v480 = vld [vmem:[%s428] sm:$0xff]
        %v481 = vld [vmem:[%s428 + $0x8] sm:$0xff]
        %v482 = vld [vmem:[%s428 + $0x10] sm:$0xff]
        %v483 = vld [vmem:[%s428 + $0x18] sm:$0xff]
        %v484 = vld [vmem:[%s428 + $0x20] sm:$0xff]
        %v485 = vld [vmem:[%s428 + $0x28] sm:$0xff]
        %v486 = vld [vmem:[%s428 + $0x30] sm:$0xff]
        %v487 = vld [vmem:[%s428 + $0x38] sm:$0xff]
        %v488 = vld [vmem:[%s419] sm:$0x3]
        %v490 = vlaneseq
        %v491 = vshrl.u32 %v490, 7
        %v492 = vsub.s32 0, %v491
        %v493 = vrot.slane %v488, %v492
        %v494 = vlaneseq
        %v495 = vshrl.u32 %v494, 7
        %v496 = vsub.s32 1, %v495
        %v497 = vrot.slane %v488, %v496
        %v508 = vunpack.c.l.b16 %v480
        %v509 = vunpack.c.h.b16 %v480
        %v510 = vunpack.c.l.b16 %v481
        %v511 = vunpack.c.h.b16 %v481
        %v512 = vunpack.c.l.b16 %v482
        %v513 = vunpack.c.h.b16 %v482
        %v514 = vunpack.c.l.b16 %v483
        %v515 = vunpack.c.h.b16 %v483
        %v516 = vunpack.c.l.b16 %v484
        %v517 = vunpack.c.h.b16 %v484
        %v518 = vunpack.c.l.b16 %v485
        %v519 = vunpack.c.h.b16 %v485
        %v520 = vunpack.c.l.b16 %v486
        %v521 = vunpack.c.h.b16 %v486
        %v522 = vunpack.c.l.b16 %v487
        %v523 = vunpack.c.h.b16 %v487
        %v524 = vpack.c.b16 %v510, %v508
        %v525 = vpack.c.b16 %v511, %v509
        %v526 = vpack.c.b16 %v514, %v512
        %v527 = vpack.c.b16 %v515, %v513
        %v528 = vpack.c.b16 %v518, %v516
        %v529 = vpack.c.b16 %v519, %v517
        %v530 = vpack.c.b16 %v522, %v520
        %v531 = vpack.c.b16 %v523, %v521
        %v541 = vsel %vm454, %v479, 0
        %543 = vmatprep.subr.bf16.mxu0 %v525
        %544 = vmatpush1.bf16.msra.mxu0 %v524
        %545 = vmatprep.subr.bf16.mxu0 %v527
        %546 = vmatpush1.bf16.msra.mxu0 %v526
        %547 = vmatprep.subr.bf16.mxu0 %v529
        %548 = vmatpush1.bf16.msra.mxu0 %v528
        %549 = vmatprep.subr.bf16.mxu0 %v531
        %550 = vmatpush1.bf16.msra.mxu0 %v530
        %551 = vmatprep.subr.bf16.mxu0 0
        %552 = vmatpush1.bf16.msra.mxu0 0
        %553 = vmatprep.subr.bf16.mxu0 0
        %554 = vmatpush1.bf16.msra.mxu0 0
        %555 = vmatprep.subr.bf16.mxu0 0
        %556 = vmatpush1.bf16.msra.mxu0 0
        %557 = vmatprep.subr.bf16.mxu0 0
        %558 = vmatpush1.bf16.msra.mxu0 0
        %559 = vmatprep.subr.bf16.mxu0 0
        %560 = vmatpush1.bf16.msra.mxu0 0
        %561 = vmatprep.subr.bf16.mxu0 0
        %562 = vmatpush1.bf16.msra.mxu0 0
        %563 = vmatprep.subr.bf16.mxu0 0
        %564 = vmatpush1.bf16.msra.mxu0 0
        %565 = vmatprep.subr.bf16.mxu0 0
        %566 = vmatpush1.bf16.msra.mxu0 0
        %567 = vmatprep.subr.bf16.mxu0 0
        %568 = vmatpush1.bf16.msra.mxu0 0
        %569 = vmatprep.subr.bf16.mxu0 0
        %570 = vmatpush1.bf16.msra.mxu0 0
        %571 = vmatprep.subr.bf16.mxu0 0
        %572 = vmatpush1.bf16.msra.mxu0 0
        %573 = vmatprep.subr.bf16.mxu0 0
        %574 = vmatpush1.bf16.msra.mxu0 0
        %575 = vmatprep.mubr.bf16.mxu0 0
        %576 = vmatmul.mubr.bf16.gmra.mrb[0].mxu0 %v541
        %v577 = vpop.f32.mrb[0].mxu0
        %v578 = vadd.f32 %v493, %v577
        %v579 = vpop.f32.mrb[0].mxu0
        %v580 = vadd.f32 %v497, %v579
        %v581 = vpop.f32.mrb[0].mxu0
        %v582 = vpop.f32.mrb[0].mxu0
        %583 = vdwg.mxu0
        %v584 = vpack.c.bf16 %v578, %v578
        %v585 = vpack.c.bf16 %v580, %v580
        %587 = vrot.lane.b32.xlu0 %v584, 112
        %v588 = vpop.permute.xlu0 %587
        %589 = vrot.lane.b32.xlu0 %v584, 96
        %v590 = vpop.permute.xlu0 %589
        %591 = vrot.lane.b32.xlu0 %v584, 80
        %v592 = vpop.permute.xlu0 %591
        %v594 = vunpack.c.l.s4 1983009808
        %v595 = vunpack.c.0.s8 %v594
        %v596 = vlaneseq
        %v597 = vshrl.u32 %v596, 7
        %v598 = vsub.s32 %v595, %v597
        %v599 = vrot.slane %v584, %v598
        %v602 = vunpack.c.l.s4 1983009808
        %v603 = vunpack.c.0.s8 %v602
        %v604 = vlaneseq
        %v605 = vshrl.u32 %v604, 7
        %v606 = vsub.s32 %v603, %v605
        %v607 = vrot.slane %v590, %v606
        %v608 = vcombine.low %v599, %v607
        %v609 = vcombine.high %v599, %v607
        %v611 = vunpack.c.l.s4 1934713408
        %v612 = vunpack.c.0.s8 %v611
        %v613 = vlaneseq
        %v614 = vshrl.u32 %v613, 7
        %v615 = vsub.s32 %v612, %v614
        %v616 = vrot.slane %v608, %v615
        %v618 = vunpack.c.l.s4 1934713408
        %v619 = vunpack.c.0.s8 %v618
        %v620 = vlaneseq
        %v621 = vshrl.u32 %v620, 7
        %v622 = vsub.s32 %v619, %v621
        %v623 = vrot.slane %v609, %v622
        %v624 = vcombine.high %v616, 0
        %v625 = vcombine.high %v623, 0
        %v628 = vunpack.c.l.s4 1983009808
        %v629 = vunpack.c.0.s8 %v628
        %v630 = vlaneseq
        %v631 = vshrl.u32 %v630, 7
        %v632 = vsub.s32 %v629, %v631
        %v633 = vrot.slane %v588, %v632
        %v636 = vunpack.c.l.s4 1983009808
        %v637 = vunpack.c.0.s8 %v636
        %v638 = vlaneseq
        %v639 = vshrl.u32 %v638, 7
        %v640 = vsub.s32 %v637, %v639
        %v641 = vrot.slane %v592, %v640
        %v642 = vcombine.low %v633, %v641
        %v643 = vcombine.high %v633, %v641
        %v645 = vunpack.c.l.s4 1934713408
        %v646 = vunpack.c.0.s8 %v645
        %v647 = vlaneseq
        %v648 = vshrl.u32 %v647, 7
        %v649 = vsub.s32 %v646, %v648
        %v650 = vrot.slane %v642, %v649
        %v652 = vunpack.c.l.s4 1934713408
        %v653 = vunpack.c.0.s8 %v652
        %v654 = vlaneseq
        %v655 = vshrl.u32 %v654, 7
        %v656 = vsub.s32 %v653, %v655
        %v657 = vrot.slane %v643, %v656
        %v658 = vcombine.high %v650, 0
        %v659 = vcombine.high %v657, 0
        %v662 = vpack.i.b16 %v650, %v616
        %v664 = vshrl.u32 %v616, 16
        %v665 = vshrl.u32 %v650, 16
        %v666 = vpack.i.b16 %v665, %v664
        %v670 = vpack.i.b16 %v658, %v624
        %v672 = vshrl.u32 %v624, 16
        %v673 = vshrl.u32 %v658, 16
        %v674 = vpack.i.b16 %v673, %v672
        %v678 = vpack.i.b16 %v657, %v623
        %v680 = vshrl.u32 %v623, 16
        %v681 = vshrl.u32 %v657, 16
        %v682 = vpack.i.b16 %v681, %v680
        %v686 = vpack.i.b16 %v659, %v625
        %v688 = vshrl.u32 %v625, 16
        %v689 = vshrl.u32 %v659, 16
        %v690 = vpack.i.b16 %v689, %v688
        %v692 = vcombine.low %v662, %v678
        %v694 = vunpack.c.l.s4 1983009808
        %v695 = vunpack.c.0.s8 %v694
        %v696 = vlaneseq
        %v697 = vshrl.u32 %v696, 7
        %v698 = vsub.s32 %v695, %v697
        %v699 = vrot.slane %v692, %v698
        %v700 = vcombine.low %v670, %v686
        %v702 = vunpack.c.l.s4 1983009808
        %v703 = vunpack.c.0.s8 %v702
        %v704 = vlaneseq
        %v705 = vshrl.u32 %v704, 7
        %v706 = vsub.s32 %v703, %v705
        %v707 = vrot.slane %v700, %v706
        %v708 = vcombine.low %v699, %v707
        %v710 = vunpack.c.l.s4 1934713408
        %v711 = vunpack.c.0.s8 %v710
        %v712 = vlaneseq
        %v713 = vshrl.u32 %v712, 7
        %v714 = vsub.s32 %v711, %v713
        %v715 = vrot.slane %v708, %v714
        %v716 = vcombine.high %v715, 0
        %v717 = vcombine.low %v666, %v682
        %v719 = vunpack.c.l.s4 1983009808
        %v720 = vunpack.c.0.s8 %v719
        %v721 = vlaneseq
        %v722 = vshrl.u32 %v721, 7
        %v723 = vsub.s32 %v720, %v722
        %v724 = vrot.slane %v717, %v723
        %v725 = vcombine.low %v674, %v690
        %v727 = vunpack.c.l.s4 1983009808
        %v728 = vunpack.c.0.s8 %v727
        %v729 = vlaneseq
        %v730 = vshrl.u32 %v729, 7
        %v731 = vsub.s32 %v728, %v730
        %v732 = vrot.slane %v725, %v731
        %v733 = vcombine.low %v724, %v732
        %v735 = vunpack.c.l.s4 1934713408
        %v736 = vunpack.c.0.s8 %v735
        %v737 = vlaneseq
        %v738 = vshrl.u32 %v737, 7
        %v739 = vsub.s32 %v736, %v738
        %v740 = vrot.slane %v733, %v739
        %v741 = vcombine.high %v740, 0
        %v744 = vpack.i.b16 %v740, %v715
        %v745 = vshrl.u32 %v715, 16
        %v746 = vshrl.u32 %v740, 16
        %v747 = vpack.i.b16 %v746, %v745
        %v750 = vpack.i.b16 %v741, %v716
        %v751 = vshrl.u32 %v716, 16
        %v752 = vshrl.u32 %v741, 16
        %v753 = vpack.i.b16 %v752, %v751
        %754 = vrot.lane.b32.xlu0 %v584, 64
        %v755 = vpop.permute.xlu0 %754
        %756 = vrot.lane.b32.xlu0 %v588, 64
        %v757 = vpop.permute.xlu0 %756
        %758 = vrot.lane.b32.xlu0 %v590, 64
        %v759 = vpop.permute.xlu0 %758
        %760 = vrot.lane.b32.xlu0 %v592, 64
        %v761 = vpop.permute.xlu0 %760
        %v764 = vunpack.c.l.s4 1983009808
        %v765 = vunpack.c.0.s8 %v764
        %v766 = vlaneseq
        %v767 = vshrl.u32 %v766, 7
        %v768 = vsub.s32 %v765, %v767
        %v769 = vrot.slane %v755, %v768
        %v772 = vunpack.c.l.s4 1983009808
        %v773 = vunpack.c.0.s8 %v772
        %v774 = vlaneseq
        %v775 = vshrl.u32 %v774, 7
        %v776 = vsub.s32 %v773, %v775
        %v777 = vrot.slane %v759, %v776
        %v778 = vcombine.low %v769, %v777
        %v779 = vcombine.high %v769, %v777
        %v781 = vunpack.c.l.s4 1934713408
        %v782 = vunpack.c.0.s8 %v781
        %v783 = vlaneseq
        %v784 = vshrl.u32 %v783, 7
        %v785 = vsub.s32 %v782, %v784
        %v786 = vrot.slane %v778, %v785
        %v788 = vunpack.c.l.s4 1934713408
        %v789 = vunpack.c.0.s8 %v788
        %v790 = vlaneseq
        %v791 = vshrl.u32 %v790, 7
        %v792 = vsub.s32 %v789, %v791
        %v793 = vrot.slane %v779, %v792
        %v794 = vcombine.high %v786, 0
        %v795 = vcombine.high %v793, 0
        %v798 = vunpack.c.l.s4 1983009808
        %v799 = vunpack.c.0.s8 %v798
        %v800 = vlaneseq
        %v801 = vshrl.u32 %v800, 7
        %v802 = vsub.s32 %v799, %v801
        %v803 = vrot.slane %v757, %v802
        %v806 = vunpack.c.l.s4 1983009808
        %v807 = vunpack.c.0.s8 %v806
        %v808 = vlaneseq
        %v809 = vshrl.u32 %v808, 7
        %v810 = vsub.s32 %v807, %v809
        %v811 = vrot.slane %v761, %v810
        %v812 = vcombine.low %v803, %v811
        %v813 = vcombine.high %v803, %v811
        %v815 = vunpack.c.l.s4 1934713408
        %v816 = vunpack.c.0.s8 %v815
        %v817 = vlaneseq
        %v818 = vshrl.u32 %v817, 7
        %v819 = vsub.s32 %v816, %v818
        %v820 = vrot.slane %v812, %v819
        %v822 = vunpack.c.l.s4 1934713408
        %v823 = vunpack.c.0.s8 %v822
        %v824 = vlaneseq
        %v825 = vshrl.u32 %v824, 7
        %v826 = vsub.s32 %v823, %v825
        %v827 = vrot.slane %v813, %v826
        %v828 = vcombine.high %v820, 0
        %v829 = vcombine.high %v827, 0
        %v832 = vpack.i.b16 %v820, %v786
        %v834 = vshrl.u32 %v786, 16
        %v835 = vshrl.u32 %v820, 16
        %v836 = vpack.i.b16 %v835, %v834
        %v840 = vpack.i.b16 %v828, %v794
        %v842 = vshrl.u32 %v794, 16
        %v843 = vshrl.u32 %v828, 16
        %v844 = vpack.i.b16 %v843, %v842
        %v848 = vpack.i.b16 %v827, %v793
        %v850 = vshrl.u32 %v793, 16
        %v851 = vshrl.u32 %v827, 16
        %v852 = vpack.i.b16 %v851, %v850
        %v856 = vpack.i.b16 %v829, %v795
        %v858 = vshrl.u32 %v795, 16
        %v859 = vshrl.u32 %v829, 16
        %v860 = vpack.i.b16 %v859, %v858
        %v862 = vcombine.low %v832, %v848
        %v864 = vunpack.c.l.s4 1983009808
        %v865 = vunpack.c.0.s8 %v864
        %v866 = vlaneseq
        %v867 = vshrl.u32 %v866, 7
        %v868 = vsub.s32 %v865, %v867
        %v869 = vrot.slane %v862, %v868
        %v870 = vcombine.low %v840, %v856
        %v872 = vunpack.c.l.s4 1983009808
        %v873 = vunpack.c.0.s8 %v872
        %v874 = vlaneseq
        %v875 = vshrl.u32 %v874, 7
        %v876 = vsub.s32 %v873, %v875
        %v877 = vrot.slane %v870, %v876
        %v878 = vcombine.low %v869, %v877
        %v880 = vunpack.c.l.s4 1934713408
        %v881 = vunpack.c.0.s8 %v880
        %v882 = vlaneseq
        %v883 = vshrl.u32 %v882, 7
        %v884 = vsub.s32 %v881, %v883
        %v885 = vrot.slane %v878, %v884
        %v886 = vcombine.high %v885, 0
        %v887 = vcombine.low %v836, %v852
        %v889 = vunpack.c.l.s4 1983009808
        %v890 = vunpack.c.0.s8 %v889
        %v891 = vlaneseq
        %v892 = vshrl.u32 %v891, 7
        %v893 = vsub.s32 %v890, %v892
        %v894 = vrot.slane %v887, %v893
        %v895 = vcombine.low %v844, %v860
        %v897 = vunpack.c.l.s4 1983009808
        %v898 = vunpack.c.0.s8 %v897
        %v899 = vlaneseq
        %v900 = vshrl.u32 %v899, 7
        %v901 = vsub.s32 %v898, %v900
        %v902 = vrot.slane %v895, %v901
        %v903 = vcombine.low %v894, %v902
        %v905 = vunpack.c.l.s4 1934713408
        %v906 = vunpack.c.0.s8 %v905
        %v907 = vlaneseq
        %v908 = vshrl.u32 %v907, 7
        %v909 = vsub.s32 %v906, %v908
        %v910 = vrot.slane %v903, %v909
        %v911 = vcombine.high %v910, 0
        %v914 = vpack.i.b16 %v910, %v885
        %v915 = vshrl.u32 %v885, 16
        %v916 = vshrl.u32 %v910, 16
        %v917 = vpack.i.b16 %v916, %v915
        %v920 = vpack.i.b16 %v911, %v886
        %v921 = vshrl.u32 %v886, 16
        %v922 = vshrl.u32 %v911, 16
        %v923 = vpack.i.b16 %v922, %v921
        %925 = vrot.lane.b32.xlu0 %v585, 112
        %v926 = vpop.permute.xlu0 %925
        %927 = vrot.lane.b32.xlu0 %v585, 96
        %v928 = vpop.permute.xlu0 %927
        %929 = vrot.lane.b32.xlu0 %v585, 80
        %v930 = vpop.permute.xlu0 %929
        %v932 = vunpack.c.l.s4 1983009808
        %v933 = vunpack.c.0.s8 %v932
        %v934 = vlaneseq
        %v935 = vshrl.u32 %v934, 7
        %v936 = vsub.s32 %v933, %v935
        %v937 = vrot.slane %v585, %v936
        %v940 = vunpack.c.l.s4 1983009808
        %v941 = vunpack.c.0.s8 %v940
        %v942 = vlaneseq
        %v943 = vshrl.u32 %v942, 7
        %v944 = vsub.s32 %v941, %v943
        %v945 = vrot.slane %v928, %v944
        %v946 = vcombine.low %v937, %v945
        %v947 = vcombine.high %v937, %v945
        %v949 = vunpack.c.l.s4 1934713408
        %v950 = vunpack.c.0.s8 %v949
        %v951 = vlaneseq
        %v952 = vshrl.u32 %v951, 7
        %v953 = vsub.s32 %v950, %v952
        %v954 = vrot.slane %v946, %v953
        %v956 = vunpack.c.l.s4 1934713408
        %v957 = vunpack.c.0.s8 %v956
        %v958 = vlaneseq
        %v959 = vshrl.u32 %v958, 7
        %v960 = vsub.s32 %v957, %v959
        %v961 = vrot.slane %v947, %v960
        %v962 = vcombine.high %v954, 0
        %v963 = vcombine.high %v961, 0
        %v966 = vunpack.c.l.s4 1983009808
        %v967 = vunpack.c.0.s8 %v966
        %v968 = vlaneseq
        %v969 = vshrl.u32 %v968, 7
        %v970 = vsub.s32 %v967, %v969
        %v971 = vrot.slane %v926, %v970
        %v974 = vunpack.c.l.s4 1983009808
        %v975 = vunpack.c.0.s8 %v974
        %v976 = vlaneseq
        %v977 = vshrl.u32 %v976, 7
        %v978 = vsub.s32 %v975, %v977
        %v979 = vrot.slane %v930, %v978
        %v980 = vcombine.low %v971, %v979
        %v981 = vcombine.high %v971, %v979
        %v983 = vunpack.c.l.s4 1934713408
        %v984 = vunpack.c.0.s8 %v983
        %v985 = vlaneseq
        %v986 = vshrl.u32 %v985, 7
        %v987 = vsub.s32 %v984, %v986
        %v988 = vrot.slane %v980, %v987
        %v990 = vunpack.c.l.s4 1934713408
        %v991 = vunpack.c.0.s8 %v990
        %v992 = vlaneseq
        %v993 = vshrl.u32 %v992, 7
        %v994 = vsub.s32 %v991, %v993
        %v995 = vrot.slane %v981, %v994
        %v996 = vcombine.high %v988, 0
        %v997 = vcombine.high %v995, 0
        %v1000 = vpack.i.b16 %v988, %v954
        %v1002 = vshrl.u32 %v954, 16
        %v1003 = vshrl.u32 %v988, 16
        %v1004 = vpack.i.b16 %v1003, %v1002
        %v1008 = vpack.i.b16 %v996, %v962
        %v1010 = vshrl.u32 %v962, 16
        %v1011 = vshrl.u32 %v996, 16
        %v1012 = vpack.i.b16 %v1011, %v1010
        %v1016 = vpack.i.b16 %v995, %v961
        %v1018 = vshrl.u32 %v961, 16
        %v1019 = vshrl.u32 %v995, 16
        %v1020 = vpack.i.b16 %v1019, %v1018
        %v1024 = vpack.i.b16 %v997, %v963
        %v1026 = vshrl.u32 %v963, 16
        %v1027 = vshrl.u32 %v997, 16
        %v1028 = vpack.i.b16 %v1027, %v1026
        %v1030 = vcombine.low %v1000, %v1016
        %v1032 = vunpack.c.l.s4 1983009808
        %v1033 = vunpack.c.0.s8 %v1032
        %v1034 = vlaneseq
        %v1035 = vshrl.u32 %v1034, 7
        %v1036 = vsub.s32 %v1033, %v1035
        %v1037 = vrot.slane %v1030, %v1036
        %v1038 = vcombine.low %v1008, %v1024
        %v1040 = vunpack.c.l.s4 1983009808
        %v1041 = vunpack.c.0.s8 %v1040
        %v1042 = vlaneseq
        %v1043 = vshrl.u32 %v1042, 7
        %v1044 = vsub.s32 %v1041, %v1043
        %v1045 = vrot.slane %v1038, %v1044
        %v1046 = vcombine.low %v1037, %v1045
        %v1048 = vunpack.c.l.s4 1934713408
        %v1049 = vunpack.c.0.s8 %v1048
        %v1050 = vlaneseq
        %v1051 = vshrl.u32 %v1050, 7
        %v1052 = vsub.s32 %v1049, %v1051
        %v1053 = vrot.slane %v1046, %v1052
        %v1054 = vcombine.high %v1053, 0
        %v1055 = vcombine.low %v1004, %v1020
        %v1057 = vunpack.c.l.s4 1983009808
        %v1058 = vunpack.c.0.s8 %v1057
        %v1059 = vlaneseq
        %v1060 = vshrl.u32 %v1059, 7
        %v1061 = vsub.s32 %v1058, %v1060
        %v1062 = vrot.slane %v1055, %v1061
        %v1063 = vcombine.low %v1012, %v1028
        %v1065 = vunpack.c.l.s4 1983009808
        %v1066 = vunpack.c.0.s8 %v1065
        %v1067 = vlaneseq
        %v1068 = vshrl.u32 %v1067, 7
        %v1069 = vsub.s32 %v1066, %v1068
        %v1070 = vrot.slane %v1063, %v1069
        %v1071 = vcombine.low %v1062, %v1070
        %v1073 = vunpack.c.l.s4 1934713408
        %v1074 = vunpack.c.0.s8 %v1073
        %v1075 = vlaneseq
        %v1076 = vshrl.u32 %v1075, 7
        %v1077 = vsub.s32 %v1074, %v1076
        %v1078 = vrot.slane %v1071, %v1077
        %v1079 = vcombine.high %v1078, 0
        %v1082 = vpack.i.b16 %v1078, %v1053
        %v1083 = vshrl.u32 %v1053, 16
        %v1084 = vshrl.u32 %v1078, 16
        %v1085 = vpack.i.b16 %v1084, %v1083
        %v1088 = vpack.i.b16 %v1079, %v1054
        %v1089 = vshrl.u32 %v1054, 16
        %v1090 = vshrl.u32 %v1079, 16
        %v1091 = vpack.i.b16 %v1090, %v1089
        %vm1092 = vcmask 130048
        %v1094 = vsel %vm1092, %v744, 0
        %v1097 = vsel %vm1092, %v914, 0
        %1099 = vmatprep.subr.bf16.mxu0 0
        %1100 = vmatpush1.bf16.xpose.msra.mxu0 %v1097
        %1101 = vmatprep.subr.bf16.mxu0 0
        %1102 = vmatpush1.bf16.xpose.msra.mxu0 0
        %1103 = vmatprep.subr.bf16.mxu0 0
        %1104 = vmatpush1.bf16.xpose.msra.mxu0 0
        %1105 = vmatprep.subr.bf16.mxu0 0
        %1106 = vmatpush1.bf16.xpose.msra.mxu0 0
        %1107 = vmatprep.subr.bf16.mxu0 0
        %1108 = vmatpush1.bf16.xpose.msra.mxu0 0
        %1109 = vmatprep.subr.bf16.mxu0 0
        %1110 = vmatpush1.bf16.xpose.msra.mxu0 0
        %1111 = vmatprep.subr.bf16.mxu0 0
        %1112 = vmatpush1.bf16.xpose.msra.mxu0 0
        %1113 = vmatprep.subr.bf16.mxu0 0
        %1114 = vmatpush1.bf16.xpose.msra.mxu0 0
        %1115 = vmatprep.subr.bf16.mxu0 0
        %1116 = vmatpush1.bf16.xpose.msra.mxu0 0
        %1117 = vmatprep.subr.bf16.mxu0 0
        %1118 = vmatpush1.bf16.xpose.msra.mxu0 0
        %1119 = vmatprep.subr.bf16.mxu0 0
        %1120 = vmatpush1.bf16.xpose.msra.mxu0 0
        %1121 = vmatprep.subr.bf16.mxu0 0
        %1122 = vmatpush1.bf16.xpose.msra.mxu0 0
        %1123 = vmatprep.subr.bf16.mxu0 0
        %1124 = vmatpush1.bf16.xpose.msra.mxu0 0
        %1125 = vmatprep.subr.bf16.mxu0 0
        %1126 = vmatpush1.bf16.xpose.msra.mxu0 0
        %1127 = vmatprep.subr.bf16.mxu0 0
        %1128 = vmatpush1.bf16.xpose.msra.mxu0 0
        %1129 = vmatprep.subr.bf16.mxu0 0
        %1130 = vmatpush1.bf16.xpose.msra.mxu0 0
        %1131 = vmatprep.mubr.bf16.mxu0 0
        %1132 = vmatmul.mubr.bf16.gmra.mrb[0].mxu0 %v1094
        %v1133 = vpop.f32.mrb[0].mxu0
        %v1134 = vadd.f32 0.0, %v1133
        %v1135 = vpop.f32.mrb[0].mxu0
        %v1136 = vpop.f32.mrb[0].mxu0
        %v1137 = vpop.f32.mrb[0].mxu0
        %1138 = vdwg.mxu0
        %v1140 = vsel %vm1092, %v747, 0
        %v1143 = vsel %vm1092, %v917, 0
        %1145 = vmatprep.subr.bf16.mxu0 0
        %1146 = vmatpush1.bf16.xpose.msra.mxu0 %v1143
        %1147 = vmatprep.subr.bf16.mxu0 0
        %1148 = vmatpush1.bf16.xpose.msra.mxu0 0
        %1149 = vmatprep.subr.bf16.mxu0 0
        %1150 = vmatpush1.bf16.xpose.msra.mxu0 0
        %1151 = vmatprep.subr.bf16.mxu0 0
        %1152 = vmatpush1.bf16.xpose.msra.mxu0 0
        %1153 = vmatprep.subr.bf16.mxu0 0
        %1154 = vmatpush1.bf16.xpose.msra.mxu0 0
        %1155 = vmatprep.subr.bf16.mxu0 0
        %1156 = vmatpush1.bf16.xpose.msra.mxu0 0
        %1157 = vmatprep.subr.bf16.mxu0 0
        %1158 = vmatpush1.bf16.xpose.msra.mxu0 0
        %1159 = vmatprep.subr.bf16.mxu0 0
        %1160 = vmatpush1.bf16.xpose.msra.mxu0 0
        %1161 = vmatprep.subr.bf16.mxu0 0
        %1162 = vmatpush1.bf16.xpose.msra.mxu0 0
        %1163 = vmatprep.subr.bf16.mxu0 0
        %1164 = vmatpush1.bf16.xpose.msra.mxu0 0
        %1165 = vmatprep.subr.bf16.mxu0 0
        %1166 = vmatpush1.bf16.xpose.msra.mxu0 0
        %1167 = vmatprep.subr.bf16.mxu0 0
        %1168 = vmatpush1.bf16.xpose.msra.mxu0 0
        %1169 = vmatprep.subr.bf16.mxu0 0
        %1170 = vmatpush1.bf16.xpose.msra.mxu0 0
        %1171 = vmatprep.subr.bf16.mxu0 0
        %1172 = vmatpush1.bf16.xpose.msra.mxu0 0
        %1173 = vmatprep.subr.bf16.mxu0 0
        %1174 = vmatpush1.bf16.xpose.msra.mxu0 0
        %1175 = vmatprep.subr.bf16.mxu0 0
        %1176 = vmatpush1.bf16.xpose.msra.mxu0 0
        %1177 = vmatprep.mubr.bf16.mxu0 0
        %1178 = vmatmul.mubr.bf16.gmra.mrb[0].mxu0 %v1140
        %v1179 = vpop.f32.mrb[0].mxu0
        %v1180 = vadd.f32 0.0, %v1179
        %v1181 = vpop.f32.mrb[0].mxu0
        %v1182 = vpop.f32.mrb[0].mxu0
        %v1183 = vpop.f32.mrb[0].mxu0
        %1184 = vdwg.mxu0
        %v1186 = vsel %vm1092, %v750, 0
        %v1189 = vsel %vm1092, %v920, 0
        %1191 = vmatprep.subr.bf16.mxu0 0
        %1192 = vmatpush1.bf16.xpose.msra.mxu0 %v1189
        %1193 = vmatprep.subr.bf16.mxu0 0
        %1194 = vmatpush1.bf16.xpose.msra.mxu0 0
        %1195 = vmatprep.subr.bf16.mxu0 0
        %1196 = vmatpush1.bf16.xpose.msra.mxu0 0
        %1197 = vmatprep.subr.bf16.mxu0 0
        %1198 = vmatpush1.bf16.xpose.msra.mxu0 0
        %1199 = vmatprep.subr.bf16.mxu0 0
        %1200 = vmatpush1.bf16.xpose.msra.mxu0 0
        %1201 = vmatprep.subr.bf16.mxu0 0
        %1202 = vmatpush1.bf16.xpose.msra.mxu0 0
        %1203 = vmatprep.subr.bf16.mxu0 0
        %1204 = vmatpush1.bf16.xpose.msra.mxu0 0
        %1205 = vmatprep.subr.bf16.mxu0 0
        %1206 = vmatpush1.bf16.xpose.msra.mxu0 0
        %1207 = vmatprep.subr.bf16.mxu0 0
        %1208 = vmatpush1.bf16.xpose.msra.mxu0 0
        %1209 = vmatprep.subr.bf16.mxu0 0
        %1210 = vmatpush1.bf16.xpose.msra.mxu0 0
        %1211 = vmatprep.subr.bf16.mxu0 0
        %1212 = vmatpush1.bf16.xpose.msra.mxu0 0
        %1213 = vmatprep.subr.bf16.mxu0 0
        %1214 = vmatpush1.bf16.xpose.msra.mxu0 0
        %1215 = vmatprep.subr.bf16.mxu0 0
        %1216 = vmatpush1.bf16.xpose.msra.mxu0 0
        %1217 = vmatprep.subr.bf16.mxu0 0
        %1218 = vmatpush1.bf16.xpose.msra.mxu0 0
        %1219 = vmatprep.subr.bf16.mxu0 0
        %1220 = vmatpush1.bf16.xpose.msra.mxu0 0
        %1221 = vmatprep.subr.bf16.mxu0 0
        %1222 = vmatpush1.bf16.xpose.msra.mxu0 0
        %1223 = vmatprep.mubr.bf16.mxu0 0
        %1224 = vmatmul.mubr.bf16.gmra.mrb[0].mxu0 %v1186
        %v1225 = vpop.f32.mrb[0].mxu0
        %v1226 = vadd.f32 0.0, %v1225
        %v1227 = vpop.f32.mrb[0].mxu0
        %v1228 = vpop.f32.mrb[0].mxu0
        %v1229 = vpop.f32.mrb[0].mxu0
        %1230 = vdwg.mxu0
        %v1232 = vsel %vm1092, %v753, 0
        %v1235 = vsel %vm1092, %v923, 0
        %1237 = vmatprep.subr.bf16.mxu0 0
        %1238 = vmatpush1.bf16.xpose.msra.mxu0 %v1235
        %1239 = vmatprep.subr.bf16.mxu0 0
        %1240 = vmatpush1.bf16.xpose.msra.mxu0 0
        %1241 = vmatprep.subr.bf16.mxu0 0
        %1242 = vmatpush1.bf16.xpose.msra.mxu0 0
        %1243 = vmatprep.subr.bf16.mxu0 0
        %1244 = vmatpush1.bf16.xpose.msra.mxu0 0
        %1245 = vmatprep.subr.bf16.mxu0 0
        %1246 = vmatpush1.bf16.xpose.msra.mxu0 0
        %1247 = vmatprep.subr.bf16.mxu0 0
        %1248 = vmatpush1.bf16.xpose.msra.mxu0 0
        %1249 = vmatprep.subr.bf16.mxu0 0
        %1250 = vmatpush1.bf16.xpose.msra.mxu0 0
        %1251 = vmatprep.subr.bf16.mxu0 0
        %1252 = vmatpush1.bf16.xpose.msra.mxu0 0
        %1253 = vmatprep.subr.bf16.mxu0 0
        %1254 = vmatpush1.bf16.xpose.msra.mxu0 0
        %1255 = vmatprep.subr.bf16.mxu0 0
        %1256 = vmatpush1.bf16.xpose.msra.mxu0 0
        %1257 = vmatprep.subr.bf16.mxu0 0
        %1258 = vmatpush1.bf16.xpose.msra.mxu0 0
        %1259 = vmatprep.subr.bf16.mxu0 0
        %1260 = vmatpush1.bf16.xpose.msra.mxu0 0
        %1261 = vmatprep.subr.bf16.mxu0 0
        %1262 = vmatpush1.bf16.xpose.msra.mxu0 0
        %1263 = vmatprep.subr.bf16.mxu0 0
        %1264 = vmatpush1.bf16.xpose.msra.mxu0 0
        %1265 = vmatprep.subr.bf16.mxu0 0
        %1266 = vmatpush1.bf16.xpose.msra.mxu0 0
        %1267 = vmatprep.subr.bf16.mxu0 0
        %1268 = vmatpush1.bf16.xpose.msra.mxu0 0
        %1269 = vmatprep.mubr.bf16.mxu0 0
        %1270 = vmatmul.mubr.bf16.gmra.mrb[0].mxu0 %v1232
        %v1271 = vpop.f32.mrb[0].mxu0
        %v1272 = vadd.f32 0.0, %v1271
        %v1273 = vpop.f32.mrb[0].mxu0
        %v1274 = vpop.f32.mrb[0].mxu0
        %v1275 = vpop.f32.mrb[0].mxu0
        %1276 = vdwg.mxu0
        %v1277 = vmul.f32 %v1134, 0.25
        %v1278 = vmul.f32 %v1180, 0.25
        %v1279 = vmul.f32 %v1226, 0.25
        %v1280 = vmul.f32 %v1272, 0.25
        %v1281 = vlaneseq
        %v1282 = vshrl.u32 %v1281, 7
        %v1283 = vlaneseq
        %v1284 = vand.u32 %v1283, 127
        %vm1285 = vcmp.ge.s32.totalorder %v1282, %v1284
        %v1286 = vsel %vm1285, 1, 0
        %vm1287 = vcmp.eq.s32.totalorder %v1286, 1
        %v1288 = vsel %vm1287, %v1277, -1e+09
        %v1289 = vsel %vm1287, %v1278, -1e+09
        %v1290 = vsel %vm1287, %v1279, -1e+09
        %v1291 = vsel %vm1287, %v1280, -1e+09
        %vm1292 = vcmask 64512
        %v1293 = vsel %vm1292, %v1288, -inf
        %1294 = vmax.xlane.f32.xlu0 %v1293
        %v1295 = vpop.xlane.xlu0 %1294
        %v1296 = vsel %vm1292, %v1289, -inf
        %1297 = vmax.xlane.f32.xlu0 %v1296
        %v1298 = vpop.xlane.xlu0 %1297
        %v1299 = vsel %vm1292, %v1290, -inf
        %1300 = vmax.xlane.f32.xlu0 %v1299
        %v1301 = vpop.xlane.xlu0 %1300
        %v1302 = vsel %vm1292, %v1291, -inf
        %1303 = vmax.xlane.f32.xlu0 %v1302
        %v1304 = vpop.xlane.xlu0 %1303
        %v1305 = vsub.f32 %v1288, %v1295
        %v1306 = vsub.f32 %v1289, %v1298
        %v1307 = vsub.f32 %v1290, %v1301
        %v1308 = vsub.f32 %v1291, %v1304
        %v1309 = vmul.f32 %v1305, 1.442695
        %v1310 = vpow.pop %v1309
        %v1311 = vmul.f32 %v1306, 1.442695
        %v1312 = vpow.pop %v1311
        %v1313 = vmul.f32 %v1307, 1.442695
        %v1314 = vpow.pop %v1313
        %v1315 = vmul.f32 %v1308, 1.442695
        %v1316 = vpow.pop %v1315
        %v1317 = vsel %vm1292, %v1310, 0.0
        %1318 = vadd.xlane.f32.xlu0 %v1317
        %v1319 = vpop.xlane.xlu0 %1318
        %v1320 = vsel %vm1292, %v1312, 0.0
        %1321 = vadd.xlane.f32.xlu0 %v1320
        %v1322 = vpop.xlane.xlu0 %1321
        %v1323 = vsel %vm1292, %v1314, 0.0
        %1324 = vadd.xlane.f32.xlu0 %v1323
        %v1325 = vpop.xlane.xlu0 %1324
        %v1326 = vsel %vm1292, %v1316, 0.0
        %1327 = vadd.xlane.f32.xlu0 %v1326
        %v1328 = vpop.xlane.xlu0 %1327
        %v1329 = vrcp.pop %v1319
        %v1330 = vrcp.pop %v1322
        %v1331 = vrcp.pop %v1325
        %v1332 = vrcp.pop %v1328
        %v1333 = vmul.f32 %v1310, %v1329
        %v1334 = vmul.f32 %v1312, %v1330
        %v1335 = vmul.f32 %v1314, %v1331
        %v1336 = vmul.f32 %v1316, %v1332
        %v1337 = vpack.c.bf16 %v1333, %v1333
        %v1338 = vpack.c.bf16 %v1334, %v1334
        %v1339 = vpack.c.bf16 %v1335, %v1335
        %v1340 = vpack.c.bf16 %v1336, %v1336
        %v1342 = vsel %vm1292, %v1337, 0
        %vm1344 = vcmask 1043456
        %v1346 = vsel %vm1344, %v1082, 0
        %1348 = vmatprep.subr.bf16.mxu0 0
        %1349 = vmatpush1.bf16.msra.mxu0 %v1346
        %1350 = vmatprep.subr.bf16.mxu0 0
        %1351 = vmatpush1.bf16.msra.mxu0 0
        %1352 = vmatprep.subr.bf16.mxu0 0
        %1353 = vmatpush1.bf16.msra.mxu0 0
        %1354 = vmatprep.subr.bf16.mxu0 0
        %1355 = vmatpush1.bf16.msra.mxu0 0
        %1356 = vmatprep.subr.bf16.mxu0 0
        %1357 = vmatpush1.bf16.msra.mxu0 0
        %1358 = vmatprep.subr.bf16.mxu0 0
        %1359 = vmatpush1.bf16.msra.mxu0 0
        %1360 = vmatprep.subr.bf16.mxu0 0
        %1361 = vmatpush1.bf16.msra.mxu0 0
        %1362 = vmatprep.subr.bf16.mxu0 0
        %1363 = vmatpush1.bf16.msra.mxu0 0
        %1364 = vmatprep.subr.bf16.mxu0 0
        %1365 = vmatpush1.bf16.msra.mxu0 0
        %1366 = vmatprep.subr.bf16.mxu0 0
        %1367 = vmatpush1.bf16.msra.mxu0 0
        %1368 = vmatprep.subr.bf16.mxu0 0
        %1369 = vmatpush1.bf16.msra.mxu0 0
        %1370 = vmatprep.subr.bf16.mxu0 0
        %1371 = vmatpush1.bf16.msra.mxu0 0
        %1372 = vmatprep.subr.bf16.mxu0 0
        %1373 = vmatpush1.bf16.msra.mxu0 0
        %1374 = vmatprep.subr.bf16.mxu0 0
        %1375 = vmatpush1.bf16.msra.mxu0 0
        %1376 = vmatprep.subr.bf16.mxu0 0
        %1377 = vmatpush1.bf16.msra.mxu0 0
        %1378 = vmatprep.subr.bf16.mxu0 0
        %1379 = vmatpush1.bf16.msra.mxu0 0
        %1380 = vmatprep.mubr.bf16.mxu0 0
        %1381 = vmatmul.mubr.bf16.gmra.mrb[0].mxu0 %v1342
        %v1382 = vpop.f32.mrb[0].mxu0
        %v1383 = vadd.f32 0.0, %v1382
        %v1384 = vpop.f32.mrb[0].mxu0
        %v1385 = vpop.f32.mrb[0].mxu0
        %v1386 = vpop.f32.mrb[0].mxu0
        %1387 = vdwg.mxu0
        %v1389 = vsel %vm1292, %v1338, 0
        %v1392 = vsel %vm1344, %v1085, 0
        %1394 = vmatprep.subr.bf16.mxu0 0
        %1395 = vmatpush1.bf16.msra.mxu0 %v1392
        %1396 = vmatprep.subr.bf16.mxu0 0
        %1397 = vmatpush1.bf16.msra.mxu0 0
        %1398 = vmatprep.subr.bf16.mxu0 0
        %1399 = vmatpush1.bf16.msra.mxu0 0
        %1400 = vmatprep.subr.bf16.mxu0 0
        %1401 = vmatpush1.bf16.msra.mxu0 0
        %1402 = vmatprep.subr.bf16.mxu0 0
        %1403 = vmatpush1.bf16.msra.mxu0 0
        %1404 = vmatprep.subr.bf16.mxu0 0
        %1405 = vmatpush1.bf16.msra.mxu0 0
        %1406 = vmatprep.subr.bf16.mxu0 0
        %1407 = vmatpush1.bf16.msra.mxu0 0
        %1408 = vmatprep.subr.bf16.mxu0 0
        %1409 = vmatpush1.bf16.msra.mxu0 0
        %1410 = vmatprep.subr.bf16.mxu0 0
        %1411 = vmatpush1.bf16.msra.mxu0 0
        %1412 = vmatprep.subr.bf16.mxu0 0
        %1413 = vmatpush1.bf16.msra.mxu0 0
        %1414 = vmatprep.subr.bf16.mxu0 0
        %1415 = vmatpush1.bf16.msra.mxu0 0
        %1416 = vmatprep.subr.bf16.mxu0 0
        %1417 = vmatpush1.bf16.msra.mxu0 0
        %1418 = vmatprep.subr.bf16.mxu0 0
        %1419 = vmatpush1.bf16.msra.mxu0 0
        %1420 = vmatprep.subr.bf16.mxu0 0
        %1421 = vmatpush1.bf16.msra.mxu0 0
        %1422 = vmatprep.subr.bf16.mxu0 0
        %1423 = vmatpush1.bf16.msra.mxu0 0
        %1424 = vmatprep.subr.bf16.mxu0 0
        %1425 = vmatpush1.bf16.msra.mxu0 0
        %1426 = vmatprep.mubr.bf16.mxu0 0
        %1427 = vmatmul.mubr.bf16.gmra.mrb[0].mxu0 %v1389
        %v1428 = vpop.f32.mrb[0].mxu0
        %v1429 = vadd.f32 0.0, %v1428
        %v1430 = vpop.f32.mrb[0].mxu0
        %v1431 = vpop.f32.mrb[0].mxu0
        %v1432 = vpop.f32.mrb[0].mxu0
        %1433 = vdwg.mxu0
        %v1435 = vsel %vm1292, %v1339, 0
        %v1438 = vsel %vm1344, %v1088, 0
        %1440 = vmatprep.subr.bf16.mxu0 0
        %1441 = vmatpush1.bf16.msra.mxu0 %v1438
        %1442 = vmatprep.subr.bf16.mxu0 0
        %1443 = vmatpush1.bf16.msra.mxu0 0
        %1444 = vmatprep.subr.bf16.mxu0 0
        %1445 = vmatpush1.bf16.msra.mxu0 0
        %1446 = vmatprep.subr.bf16.mxu0 0
        %1447 = vmatpush1.bf16.msra.mxu0 0
        %1448 = vmatprep.subr.bf16.mxu0 0
        %1449 = vmatpush1.bf16.msra.mxu0 0
        %1450 = vmatprep.subr.bf16.mxu0 0
        %1451 = vmatpush1.bf16.msra.mxu0 0
        %1452 = vmatprep.subr.bf16.mxu0 0
        %1453 = vmatpush1.bf16.msra.mxu0 0
        %1454 = vmatprep.subr.bf16.mxu0 0
        %1455 = vmatpush1.bf16.msra.mxu0 0
        %1456 = vmatprep.subr.bf16.mxu0 0
        %1457 = vmatpush1.bf16.msra.mxu0 0
        %1458 = vmatprep.subr.bf16.mxu0 0
        %1459 = vmatpush1.bf16.msra.mxu0 0
        %1460 = vmatprep.subr.bf16.mxu0 0
        %1461 = vmatpush1.bf16.msra.mxu0 0
        %1462 = vmatprep.subr.bf16.mxu0 0
        %1463 = vmatpush1.bf16.msra.mxu0 0
        %1464 = vmatprep.subr.bf16.mxu0 0
        %1465 = vmatpush1.bf16.msra.mxu0 0
        %1466 = vmatprep.subr.bf16.mxu0 0
        %1467 = vmatpush1.bf16.msra.mxu0 0
        %1468 = vmatprep.subr.bf16.mxu0 0
        %1469 = vmatpush1.bf16.msra.mxu0 0
        %1470 = vmatprep.subr.bf16.mxu0 0
        %1471 = vmatpush1.bf16.msra.mxu0 0
        %1472 = vmatprep.mubr.bf16.mxu0 0
        %1473 = vmatmul.mubr.bf16.gmra.mrb[0].mxu0 %v1435
        %v1474 = vpop.f32.mrb[0].mxu0
        %v1475 = vadd.f32 0.0, %v1474
        %v1476 = vpop.f32.mrb[0].mxu0
        %v1477 = vpop.f32.mrb[0].mxu0
        %v1478 = vpop.f32.mrb[0].mxu0
        %1479 = vdwg.mxu0
        %v1481 = vsel %vm1292, %v1340, 0
        %v1484 = vsel %vm1344, %v1091, 0
        %1486 = vmatprep.subr.bf16.mxu0 0
        %1487 = vmatpush1.bf16.msra.mxu0 %v1484
        %1488 = vmatprep.subr.bf16.mxu0 0
        %1489 = vmatpush1.bf16.msra.mxu0 0
        %1490 = vmatprep.subr.bf16.mxu0 0
        %1491 = vmatpush1.bf16.msra.mxu0 0
        %1492 = vmatprep.subr.bf16.mxu0 0
        %1493 = vmatpush1.bf16.msra.mxu0 0
        %1494 = vmatprep.subr.bf16.mxu0 0
        %1495 = vmatpush1.bf16.msra.mxu0 0
        %1496 = vmatprep.subr.bf16.mxu0 0
        %1497 = vmatpush1.bf16.msra.mxu0 0
        %1498 = vmatprep.subr.bf16.mxu0 0
        %1499 = vmatpush1.bf16.msra.mxu0 0
        %1500 = vmatprep.subr.bf16.mxu0 0
        %1501 = vmatpush1.bf16.msra.mxu0 0
        %1502 = vmatprep.subr.bf16.mxu0 0
        %1503 = vmatpush1.bf16.msra.mxu0 0
        %1504 = vmatprep.subr.bf16.mxu0 0
        %1505 = vmatpush1.bf16.msra.mxu0 0
        %1506 = vmatprep.subr.bf16.mxu0 0
        %1507 = vmatpush1.bf16.msra.mxu0 0
        %1508 = vmatprep.subr.bf16.mxu0 0
        %1509 = vmatpush1.bf16.msra.mxu0 0
        %1510 = vmatprep.subr.bf16.mxu0 0
        %1511 = vmatpush1.bf16.msra.mxu0 0
        %1512 = vmatprep.subr.bf16.mxu0 0
        %1513 = vmatpush1.bf16.msra.mxu0 0
        %1514 = vmatprep.subr.bf16.mxu0 0
        %1515 = vmatpush1.bf16.msra.mxu0 0
        %1516 = vmatprep.subr.bf16.mxu0 0
        %1517 = vmatpush1.bf16.msra.mxu0 0
        %1518 = vmatprep.mubr.bf16.mxu0 0
        %1519 = vmatmul.mubr.bf16.gmra.mrb[0].mxu0 %v1481
        %v1520 = vpop.f32.mrb[0].mxu0
        %v1521 = vadd.f32 0.0, %v1520
        %v1522 = vpop.f32.mrb[0].mxu0
        %v1523 = vpop.f32.mrb[0].mxu0
        %v1524 = vpop.f32.mrb[0].mxu0
        %1525 = vdwg.mxu0
        %v1526 = vcombine.low %v1383, %v1475
        %v1527 = vcombine.high %v1383, %v1475
        %v1529 = vunpack.c.l.s4 1983009808
        %v1530 = vunpack.c.0.s8 %v1529
        %v1531 = vlaneseq
        %v1532 = vshrl.u32 %v1531, 7
        %v1533 = vsub.s32 %v1530, %v1532
        %v1534 = vrot.slane %v1526, %v1533
        %v1536 = vunpack.c.l.s4 1983009808
        %v1537 = vunpack.c.0.s8 %v1536
        %v1538 = vlaneseq
        %v1539 = vshrl.u32 %v1538, 7
        %v1540 = vsub.s32 %v1537, %v1539
        %v1541 = vrot.slane %v1527, %v1540
        %v1542 = vcombine.low %v1429, %v1521
        %v1543 = vcombine.high %v1429, %v1521
        %v1545 = vunpack.c.l.s4 1983009808
        %v1546 = vunpack.c.0.s8 %v1545
        %v1547 = vlaneseq
        %v1548 = vshrl.u32 %v1547, 7
        %v1549 = vsub.s32 %v1546, %v1548
        %v1550 = vrot.slane %v1542, %v1549
        %v1552 = vunpack.c.l.s4 1983009808
        %v1553 = vunpack.c.0.s8 %v1552
        %v1554 = vlaneseq
        %v1555 = vshrl.u32 %v1554, 7
        %v1556 = vsub.s32 %v1553, %v1555
        %v1557 = vrot.slane %v1543, %v1556
        %v1558 = vcombine.low %v1534, %v1550
        %v1559 = vcombine.high %v1534, %v1550
        %v1561 = vunpack.c.l.s4 1934713408
        %v1562 = vunpack.c.0.s8 %v1561
        %v1563 = vlaneseq
        %v1564 = vshrl.u32 %v1563, 7
        %v1565 = vsub.s32 %v1562, %v1564
        %v1566 = vrot.slane %v1558, %v1565
        %v1568 = vunpack.c.l.s4 1934713408
        %v1569 = vunpack.c.0.s8 %v1568
        %v1570 = vlaneseq
        %v1571 = vshrl.u32 %v1570, 7
        %v1572 = vsub.s32 %v1569, %v1571
        %v1573 = vrot.slane %v1559, %v1572
        %v1574 = vcombine.low %v1541, %v1557
        %v1575 = vcombine.high %v1541, %v1557
        %v1577 = vunpack.c.l.s4 1934713408
        %v1578 = vunpack.c.0.s8 %v1577
        %v1579 = vlaneseq
        %v1580 = vshrl.u32 %v1579, 7
        %v1581 = vsub.s32 %v1578, %v1580
        %v1582 = vrot.slane %v1574, %v1581
        %v1584 = vunpack.c.l.s4 1934713408
        %v1585 = vunpack.c.0.s8 %v1584
        %v1586 = vlaneseq
        %v1587 = vshrl.u32 %v1586, 7
        %v1588 = vsub.s32 %v1585, %v1587
        %v1589 = vrot.slane %v1575, %v1588
        %v1590 = vcombine.high %v1566, 0.0
        %v1591 = vcombine.high %v1573, 0.0
        %v1592 = vcombine.high %v1582, 0.0
        %v1593 = vcombine.high %v1589, 0.0
        %v1594 = vcombine.low %v1566, %v1573
        %v1596 = vunpack.c.l.s4 1983009808
        %v1597 = vunpack.c.0.s8 %v1596
        %v1598 = vlaneseq
        %v1599 = vshrl.u32 %v1598, 7
        %v1600 = vsub.s32 %v1597, %v1599
        %v1601 = vrot.slane %v1594, %v1600
        %v1602 = vcombine.low %v1590, %v1591
        %v1604 = vunpack.c.l.s4 1983009808
        %v1605 = vunpack.c.0.s8 %v1604
        %v1606 = vlaneseq
        %v1607 = vshrl.u32 %v1606, 7
        %v1608 = vsub.s32 %v1605, %v1607
        %v1609 = vrot.slane %v1602, %v1608
        %v1610 = vcombine.low %v1582, %v1589
        %v1612 = vunpack.c.l.s4 1983009808
        %v1613 = vunpack.c.0.s8 %v1612
        %v1614 = vlaneseq
        %v1615 = vshrl.u32 %v1614, 7
        %v1616 = vsub.s32 %v1613, %v1615
        %v1617 = vrot.slane %v1610, %v1616
        %v1618 = vcombine.low %v1592, %v1593
        %v1620 = vunpack.c.l.s4 1983009808
        %v1621 = vunpack.c.0.s8 %v1620
        %v1622 = vlaneseq
        %v1623 = vshrl.u32 %v1622, 7
        %v1624 = vsub.s32 %v1621, %v1623
        %v1625 = vrot.slane %v1618, %v1624
        %v1626 = vcombine.low %v1601, %v1609
        %v1627 = vcombine.high %v1601, %v1609
        %v1629 = vunpack.c.l.s4 1934713408
        %v1630 = vunpack.c.0.s8 %v1629
        %v1631 = vlaneseq
        %v1632 = vshrl.u32 %v1631, 7
        %v1633 = vsub.s32 %v1630, %v1632
        %v1634 = vrot.slane %v1626, %v1633
        %v1636 = vunpack.c.l.s4 1934713408
        %v1637 = vunpack.c.0.s8 %v1636
        %v1638 = vlaneseq
        %v1639 = vshrl.u32 %v1638, 7
        %v1640 = vsub.s32 %v1637, %v1639
        %v1641 = vrot.slane %v1627, %v1640
        %v1642 = vcombine.low %v1617, %v1625
        %v1643 = vcombine.high %v1617, %v1625
        %v1645 = vunpack.c.l.s4 1934713408
        %v1646 = vunpack.c.0.s8 %v1645
        %v1647 = vlaneseq
        %v1648 = vshrl.u32 %v1647, 7
        %v1649 = vsub.s32 %v1646, %v1648
        %v1650 = vrot.slane %v1642, %v1649
        %v1652 = vunpack.c.l.s4 1934713408
        %v1653 = vunpack.c.0.s8 %v1652
        %v1654 = vlaneseq
        %v1655 = vshrl.u32 %v1654, 7
        %v1656 = vsub.s32 %v1653, %v1655
        %v1657 = vrot.slane %v1643, %v1656
        %v1658 = vcombine.low %v1634, %v1650
        %v1659 = vcombine.high %v1634, %v1650
        %v1660 = vcombine.low %v1641, %v1657
        %v1661 = vcombine.high %v1641, %v1657
        %1663 = vrot.lane.b32.xlu0 %v1659, 16
        %v1664 = vpop.permute.xlu0 %1663
        %1667 = vrot.lane.b32.xlu0 %v1660, 32
        %v1668 = vpop.permute.xlu0 %1667
        %1671 = vrot.lane.b32.xlu0 %v1661, 48
        %v1672 = vpop.permute.xlu0 %1671
        %v1674 = vsel %vm1092, %v1658, %v1664
        %vm1675 = vcmask 261120
        %v1676 = vsel %vm1675, %v1674, %v1668
        %vm1677 = vcmask 392192
        %v1678 = vsel %vm1677, %v1676, %v1672
        %v1679 = vpack.c.bf16 %v1678, %v1678
        %v1680 = vld [vmem:[%s433] sm:$0xf]
        %v1681 = vld [vmem:[%s433 + $0x4] sm:$0xf]
        %v1682 = vld [vmem:[%s433 + $0x8] sm:$0xf]
        %v1683 = vld [vmem:[%s433 + $0xc] sm:$0xf]
        %v1684 = vld [vmem:[%s433 + $0x10] sm:$0xf]
        %v1685 = vld [vmem:[%s433 + $0x14] sm:$0xf]
        %v1686 = vld [vmem:[%s433 + $0x18] sm:$0xf]
        %v1687 = vld [vmem:[%s433 + $0x1c] sm:$0xf]
        %v1688 = vlaneseq
        %v1689 = vshrl.u32 %v1688, 7
        %v1690 = vsub.s32 4, %v1689
        %v1691 = vrot.slane %v453, %v1690
        %v1700 = vunpack.c.l.b16 %v1680
        %v1701 = vunpack.c.l.b16 %v1681
        %v1702 = vunpack.c.l.b16 %v1682
        %v1703 = vunpack.c.l.b16 %v1683
        %v1704 = vunpack.c.l.b16 %v1684
        %v1705 = vunpack.c.l.b16 %v1685
        %v1706 = vunpack.c.l.b16 %v1686
        %v1707 = vunpack.c.l.b16 %v1687
        %v1708 = vpack.c.b16 %v1701, %v1700
        %v1709 = vpack.c.b16 %v1703, %v1702
        %v1710 = vpack.c.b16 %v1705, %v1704
        %v1711 = vpack.c.b16 %v1707, %v1706
        %v1717 = vsel %vm454, %v1679, 0
        %1719 = vmatprep.subr.bf16.mxu0 0
        %1720 = vmatpush1.bf16.msra.mxu0 %v1708
        %1721 = vmatprep.subr.bf16.mxu0 0
        %1722 = vmatpush1.bf16.msra.mxu0 %v1709
        %1723 = vmatprep.subr.bf16.mxu0 0
        %1724 = vmatpush1.bf16.msra.mxu0 %v1710
        %1725 = vmatprep.subr.bf16.mxu0 0
        %1726 = vmatpush1.bf16.msra.mxu0 %v1711
        %1727 = vmatprep.subr.bf16.mxu0 0
        %1728 = vmatpush1.bf16.msra.mxu0 0
        %1729 = vmatprep.subr.bf16.mxu0 0
        %1730 = vmatpush1.bf16.msra.mxu0 0
        %1731 = vmatprep.subr.bf16.mxu0 0
        %1732 = vmatpush1.bf16.msra.mxu0 0
        %1733 = vmatprep.subr.bf16.mxu0 0
        %1734 = vmatpush1.bf16.msra.mxu0 0
        %1735 = vmatprep.subr.bf16.mxu0 0
        %1736 = vmatpush1.bf16.msra.mxu0 0
        %1737 = vmatprep.subr.bf16.mxu0 0
        %1738 = vmatpush1.bf16.msra.mxu0 0
        %1739 = vmatprep.subr.bf16.mxu0 0
        %1740 = vmatpush1.bf16.msra.mxu0 0
        %1741 = vmatprep.subr.bf16.mxu0 0
        %1742 = vmatpush1.bf16.msra.mxu0 0
        %1743 = vmatprep.subr.bf16.mxu0 0
        %1744 = vmatpush1.bf16.msra.mxu0 0
        %1745 = vmatprep.subr.bf16.mxu0 0
        %1746 = vmatpush1.bf16.msra.mxu0 0
        %1747 = vmatprep.subr.bf16.mxu0 0
        %1748 = vmatpush1.bf16.msra.mxu0 0
        %1749 = vmatprep.subr.bf16.mxu0 0
        %1750 = vmatpush1.bf16.msra.mxu0 0
        %1751 = vmatprep.mubr.bf16.mxu0 0
        %1752 = vmatmul.mubr.bf16.gmra.mrb[0].mxu0 %v1717
        %v1753 = vpop.f32.mrb[0].mxu0
        %v1754 = vadd.f32 %v1691, %v1753
        %v1755 = vpop.f32.mrb[0].mxu0
        %v1756 = vpop.f32.mrb[0].mxu0
        %v1757 = vpop.f32.mrb[0].mxu0
        %1758 = vdwg.mxu0
        %v1759 = vadd.f32 %v452, %v1754
        %v1760 = vsel %vm454, %v1759, 0.0
        %1761 = vadd.xlane.f32.xlu0 %v1760
        %v1762 = vpop.xlane.xlu0 %1761
        %v1763 = vmul.f32 %v1762, %v458
        %v1764 = vsub.f32 %v1759, %v1763
        %v1765 = vmul.f32 %v1764, %v1764
        %v1766 = vsel %vm454, %v1765, 0.0
        %1767 = vadd.xlane.f32.xlu0 %v1766
        %v1768 = vpop.xlane.xlu0 %1767
        %v1769 = vmul.f32 %v1768, %v458
        %v1770 = vadd.f32 %v1769, 1e-05
        %v1771 = vrsqrt.pop %v1770
        %v1772 = vmul.f32 %v1764, %v1771
        %v1773 = vlaneseq
        %v1774 = vshrl.u32 %v1773, 7
        %v1775 = vsub.s32 2, %v1774
        %v1776 = vrot.slane %v453, %v1775
        %v1777 = vmul.f32 %v1772, %v1776
        %v1778 = vlaneseq
        %v1779 = vshrl.u32 %v1778, 7
        %v1780 = vsub.s32 3, %v1779
        %v1781 = vrot.slane %v453, %v1780
        %v1782 = vadd.f32 %v1777, %v1781
        %v1783 = vpack.c.bf16 %v1782, %v1782
        %v1784 = vld [vmem:[%s438] sm:$0xff]
        %v1785 = vld [vmem:[%s438 + $0x8] sm:$0xff]
        %v1786 = vld [vmem:[%s438 + $0x10] sm:$0xff]
        %v1787 = vld [vmem:[%s438 + $0x18] sm:$0xff]
        %v1788 = vld [vmem:[%s438 + $0x20] sm:$0xff]
        %v1789 = vld [vmem:[%s438 + $0x28] sm:$0xff]
        %v1790 = vld [vmem:[%s438 + $0x30] sm:$0xff]
        %v1791 = vld [vmem:[%s438 + $0x38] sm:$0xff]
        %v1792 = vld [vmem:[%s423] sm:$0x3]
        %v1794 = vlaneseq
        %v1795 = vshrl.u32 %v1794, 7
        %v1796 = vsub.s32 0, %v1795
        %v1797 = vrot.slane %v1792, %v1796
        %v1798 = vlaneseq
        %v1799 = vshrl.u32 %v1798, 7
        %v1800 = vsub.s32 1, %v1799
        %v1801 = vrot.slane %v1792, %v1800
        %v1812 = vunpack.c.l.b16 %v1784
        %v1813 = vunpack.c.h.b16 %v1784
        %v1814 = vunpack.c.l.b16 %v1785
        %v1815 = vunpack.c.h.b16 %v1785
        %v1816 = vunpack.c.l.b16 %v1786
        %v1817 = vunpack.c.h.b16 %v1786
        %v1818 = vunpack.c.l.b16 %v1787
        %v1819 = vunpack.c.h.b16 %v1787
        %v1820 = vunpack.c.l.b16 %v1788
        %v1821 = vunpack.c.h.b16 %v1788
        %v1822 = vunpack.c.l.b16 %v1789
        %v1823 = vunpack.c.h.b16 %v1789
        %v1824 = vunpack.c.l.b16 %v1790
        %v1825 = vunpack.c.h.b16 %v1790
        %v1826 = vunpack.c.l.b16 %v1791
        %v1827 = vunpack.c.h.b16 %v1791
        %v1828 = vpack.c.b16 %v1814, %v1812
        %v1829 = vpack.c.b16 %v1815, %v1813
        %v1830 = vpack.c.b16 %v1818, %v1816
        %v1831 = vpack.c.b16 %v1819, %v1817
        %v1832 = vpack.c.b16 %v1822, %v1820
        %v1833 = vpack.c.b16 %v1823, %v1821
        %v1834 = vpack.c.b16 %v1826, %v1824
        %v1835 = vpack.c.b16 %v1827, %v1825
        %v1845 = vsel %vm454, %v1783, 0
        %1847 = vmatprep.subr.bf16.mxu0 %v1829
        %1848 = vmatpush1.bf16.msra.mxu0 %v1828
        %1849 = vmatprep.subr.bf16.mxu0 %v1831
        %1850 = vmatpush1.bf16.msra.mxu0 %v1830
        %1851 = vmatprep.subr.bf16.mxu0 %v1833
        %1852 = vmatpush1.bf16.msra.mxu0 %v1832
        %1853 = vmatprep.subr.bf16.mxu0 %v1835
        %1854 = vmatpush1.bf16.msra.mxu0 %v1834
        %1855 = vmatprep.subr.bf16.mxu0 0
        %1856 = vmatpush1.bf16.msra.mxu0 0
        %1857 = vmatprep.subr.bf16.mxu0 0
        %1858 = vmatpush1.bf16.msra.mxu0 0
        %1859 = vmatprep.subr.bf16.mxu0 0
        %1860 = vmatpush1.bf16.msra.mxu0 0
        %1861 = vmatprep.subr.bf16.mxu0 0
        %1862 = vmatpush1.bf16.msra.mxu0 0
        %1863 = vmatprep.subr.bf16.mxu0 0
        %1864 = vmatpush1.bf16.msra.mxu0 0
        %1865 = vmatprep.subr.bf16.mxu0 0
        %1866 = vmatpush1.bf16.msra.mxu0 0
        %1867 = vmatprep.subr.bf16.mxu0 0
        %1868 = vmatpush1.bf16.msra.mxu0 0
        %1869 = vmatprep.subr.bf16.mxu0 0
        %1870 = vmatpush1.bf16.msra.mxu0 0
        %1871 = vmatprep.subr.bf16.mxu0 0
        %1872 = vmatpush1.bf16.msra.mxu0 0
        %1873 = vmatprep.subr.bf16.mxu0 0
        %1874 = vmatpush1.bf16.msra.mxu0 0
        %1875 = vmatprep.subr.bf16.mxu0 0
        %1876 = vmatpush1.bf16.msra.mxu0 0
        %1877 = vmatprep.subr.bf16.mxu0 0
        %1878 = vmatpush1.bf16.msra.mxu0 0
        %1879 = vmatprep.mubr.bf16.mxu0 0
        %1880 = vmatmul.mubr.bf16.gmra.mrb[0].mxu0 %v1845
        %v1881 = vpop.f32.mrb[0].mxu0
        %v1882 = vadd.f32 %v1797, %v1881
        %v1883 = vpop.f32.mrb[0].mxu0
        %v1884 = vadd.f32 %v1801, %v1883
        %v1885 = vpop.f32.mrb[0].mxu0
        %v1886 = vpop.f32.mrb[0].mxu0
        %1887 = vdwg.mxu0
        %v1888 = vmul.f32 %v1882, %v1882
        %v1889 = vmul.f32 %v1884, %v1884
        %v1890 = vmul.f32 %v1882, %v1888
        %v1891 = vmul.f32 %v1884, %v1889
        %v1892 = vmul.f32 %v1890, 0.044715
        %v1893 = vmul.f32 %v1891, 0.044715
        %v1894 = vadd.f32 %v1882, %v1892
        %v1895 = vadd.f32 %v1884, %v1893
        %v1896 = vmul.f32 %v1894, 0.7978846
        %v1897 = vmul.f32 %v1895, 0.7978846
        %v1898 = vtanh.pop %v1896
        %v1899 = vtanh.pop %v1897
        %v1900 = vadd.f32 %v1898, 1.0
        %v1901 = vadd.f32 %v1899, 1.0
        %v1902 = vmul.f32 %v1900, 0.5
        %v1903 = vmul.f32 %v1901, 0.5
        %v1904 = vmul.f32 %v1882, %v1902
        %v1905 = vmul.f32 %v1884, %v1903
        %v1906 = vpack.c.bf16 %v1904, %v1904
        %v1907 = vpack.c.bf16 %v1905, %v1905
        %v1908 = vld [vmem:[%s443] sm:$0xf]
        %v1909 = vld [vmem:[%s443 + $0x4] sm:$0xf]
        %v1910 = vld [vmem:[%s443 + $0x8] sm:$0xf]
        %v1911 = vld [vmem:[%s443 + $0xc] sm:$0xf]
        %v1912 = vld [vmem:[%s443 + $0x10] sm:$0xf]
        %v1913 = vld [vmem:[%s443 + $0x14] sm:$0xf]
        %v1914 = vld [vmem:[%s443 + $0x18] sm:$0xf]
        %v1915 = vld [vmem:[%s443 + $0x1c] sm:$0xf]
        %v1916 = vld [vmem:[%s443 + $0x20] sm:$0xf]
        %v1917 = vld [vmem:[%s443 + $0x24] sm:$0xf]
        %v1918 = vld [vmem:[%s443 + $0x28] sm:$0xf]
        %v1919 = vld [vmem:[%s443 + $0x2c] sm:$0xf]
        %v1920 = vld [vmem:[%s443 + $0x30] sm:$0xf]
        %v1921 = vld [vmem:[%s443 + $0x34] sm:$0xf]
        %v1922 = vld [vmem:[%s443 + $0x38] sm:$0xf]
        %v1923 = vld [vmem:[%s443 + $0x3c] sm:$0xf]
        %v1924 = vld [vmem:[%s443 + $0x40] sm:$0xf]
        %v1925 = vld [vmem:[%s443 + $0x44] sm:$0xf]
        %v1926 = vld [vmem:[%s443 + $0x48] sm:$0xf]
        %v1927 = vld [vmem:[%s443 + $0x4c] sm:$0xf]
        %v1928 = vld [vmem:[%s443 + $0x50] sm:$0xf]
        %v1929 = vld [vmem:[%s443 + $0x54] sm:$0xf]
        %v1930 = vld [vmem:[%s443 + $0x58] sm:$0xf]
        %v1931 = vld [vmem:[%s443 + $0x5c] sm:$0xf]
        %v1932 = vld [vmem:[%s443 + $0x60] sm:$0xf]
        %v1933 = vld [vmem:[%s443 + $0x64] sm:$0xf]
        %v1934 = vld [vmem:[%s443 + $0x68] sm:$0xf]
        %v1935 = vld [vmem:[%s443 + $0x6c] sm:$0xf]
        %v1936 = vld [vmem:[%s443 + $0x70] sm:$0xf]
        %v1937 = vld [vmem:[%s443 + $0x74] sm:$0xf]
        %v1938 = vld [vmem:[%s443 + $0x78] sm:$0xf]
        %v1939 = vld [vmem:[%s443 + $0x7c] sm:$0xf]
        %v1940 = vlaneseq
        %v1941 = vshrl.u32 %v1940, 7
        %v1942 = vsub.s32 5, %v1941
        %v1943 = vrot.slane %v453, %v1942
        %v1976 = vunpack.c.l.b16 %v1908
        %v1977 = vunpack.c.l.b16 %v1909
        %v1978 = vunpack.c.l.b16 %v1910
        %v1979 = vunpack.c.l.b16 %v1911
        %v1980 = vunpack.c.l.b16 %v1912
        %v1981 = vunpack.c.l.b16 %v1913
        %v1982 = vunpack.c.l.b16 %v1914
        %v1983 = vunpack.c.l.b16 %v1915
        %v1984 = vunpack.c.l.b16 %v1916
        %v1985 = vunpack.c.l.b16 %v1917
        %v1986 = vunpack.c.l.b16 %v1918
        %v1987 = vunpack.c.l.b16 %v1919
        %v1988 = vunpack.c.l.b16 %v1920
        %v1989 = vunpack.c.l.b16 %v1921
        %v1990 = vunpack.c.l.b16 %v1922
        %v1991 = vunpack.c.l.b16 %v1923
        %v1992 = vunpack.c.l.b16 %v1924
        %v1993 = vunpack.c.l.b16 %v1925
        %v1994 = vunpack.c.l.b16 %v1926
        %v1995 = vunpack.c.l.b16 %v1927
        %v1996 = vunpack.c.l.b16 %v1928
        %v1997 = vunpack.c.l.b16 %v1929
        %v1998 = vunpack.c.l.b16 %v1930
        %v1999 = vunpack.c.l.b16 %v1931
        %v2000 = vunpack.c.l.b16 %v1932
        %v2001 = vunpack.c.l.b16 %v1933
        %v2002 = vunpack.c.l.b16 %v1934
        %v2003 = vunpack.c.l.b16 %v1935
        %v2004 = vunpack.c.l.b16 %v1936
        %v2005 = vunpack.c.l.b16 %v1937
        %v2006 = vunpack.c.l.b16 %v1938
        %v2007 = vunpack.c.l.b16 %v1939
        %v2008 = vpack.c.b16 %v1977, %v1976
        %v2009 = vpack.c.b16 %v1979, %v1978
        %v2010 = vpack.c.b16 %v1981, %v1980
        %v2011 = vpack.c.b16 %v1983, %v1982
        %v2012 = vpack.c.b16 %v1985, %v1984
        %v2013 = vpack.c.b16 %v1987, %v1986
        %v2014 = vpack.c.b16 %v1989, %v1988
        %v2015 = vpack.c.b16 %v1991, %v1990
        %v2016 = vpack.c.b16 %v1993, %v1992
        %v2017 = vpack.c.b16 %v1995, %v1994
        %v2018 = vpack.c.b16 %v1997, %v1996
        %v2019 = vpack.c.b16 %v1999, %v1998
        %v2020 = vpack.c.b16 %v2001, %v2000
        %v2021 = vpack.c.b16 %v2003, %v2002
        %v2022 = vpack.c.b16 %v2005, %v2004
        %v2023 = vpack.c.b16 %v2007, %v2006
        %2040 = vmatprep.subr.bf16.mxu0 0
        %2041 = vmatpush1.bf16.msra.mxu0 %v2008
        %2042 = vmatprep.subr.bf16.mxu0 0
        %2043 = vmatpush1.bf16.msra.mxu0 %v2009
        %2044 = vmatprep.subr.bf16.mxu0 0
        %2045 = vmatpush1.bf16.msra.mxu0 %v2010
        %2046 = vmatprep.subr.bf16.mxu0 0
        %2047 = vmatpush1.bf16.msra.mxu0 %v2011
        %2048 = vmatprep.subr.bf16.mxu0 0
        %2049 = vmatpush1.bf16.msra.mxu0 %v2012
        %2050 = vmatprep.subr.bf16.mxu0 0
        %2051 = vmatpush1.bf16.msra.mxu0 %v2013
        %2052 = vmatprep.subr.bf16.mxu0 0
        %2053 = vmatpush1.bf16.msra.mxu0 %v2014
        %2054 = vmatprep.subr.bf16.mxu0 0
        %2055 = vmatpush1.bf16.msra.mxu0 %v2015
        %2056 = vmatprep.subr.bf16.mxu0 0
        %2057 = vmatpush1.bf16.msra.mxu0 %v2016
        %2058 = vmatprep.subr.bf16.mxu0 0
        %2059 = vmatpush1.bf16.msra.mxu0 %v2017
        %2060 = vmatprep.subr.bf16.mxu0 0
        %2061 = vmatpush1.bf16.msra.mxu0 %v2018
        %2062 = vmatprep.subr.bf16.mxu0 0
        %2063 = vmatpush1.bf16.msra.mxu0 %v2019
        %2064 = vmatprep.subr.bf16.mxu0 0
        %2065 = vmatpush1.bf16.msra.mxu0 %v2020
        %2066 = vmatprep.subr.bf16.mxu0 0
        %2067 = vmatpush1.bf16.msra.mxu0 %v2021
        %2068 = vmatprep.subr.bf16.mxu0 0
        %2069 = vmatpush1.bf16.msra.mxu0 %v2022
        %2070 = vmatprep.subr.bf16.mxu0 0
        %2071 = vmatpush1.bf16.msra.mxu0 %v2023
        %2072 = vmatprep.mubr.bf16.mxu0 %v1907
        %2073 = vmatmul.mubr.bf16.gmra.mrb[0].mxu0 %v1906
        %v2074 = vpop.f32.mrb[0].mxu0
        %v2075 = vadd.f32 %v1943, %v2074
        %v2076 = vpop.f32.mrb[0].mxu0
        %v2077 = vpop.f32.mrb[0].mxu0
        %v2078 = vpop.f32.mrb[0].mxu0
        %2079 = vdwg.mxu0
        %v2080 = vadd.f32 %v1759, %v2075
        %2081 = vst.msk [vmem:[#allocation2] sm:$0xff] %vm454, %v2080
        %p2082 = scmp.eq.s32.totalorder %s27, 1
        // Predicated region
        $region57: #{tpu_custom_call.1} parent=51 // pred_check
          %p2083 = pneg %p2082
        $region58: #{tpu_custom_call.1} parent=51 // pred_check_branch
          %2085 = sbr.rel (%p2083) target = $region60
        $region59: #{tpu_custom_call.1} parent=51 // pred_region
          %2086 = vst.msk [vmem:[%s407] sm:$0xff] %vm454, %v2080
        $region60: #{tpu_custom_call.1} parent=51 // pred_fallthru
          _
        %s2087 = sand.u32 %s250, 1
        %s2088 = scalar_lea.sflag [#allocation4], %s2087
        %s2089 = sand.u32 %s250, 1
        %s2090 = smul.addr %s2089, 8
        %s2091 = scalar_lea.vmem [#allocation3], %s2090
        // Predicated region
        $region61: #{tpu_custom_call.1} parent=51 // pred_check
          %p2092 = pneg %p260
        $region62: #{tpu_custom_call.1} parent=51 // pred_check_branch
          %2094 = sbr.rel (%p2092) target = $region64
        $region63: #{tpu_custom_call.1} parent=51 // pred_region
          %s2096 = ssub.s32 128, 128
          %2097 = vsyncadd %s2088, %s2096
          %s2098 = smul.addr %s26, 128
          %s2099 = scalar_lea.hbm %s8, %s2098
          %s2101 = sshll.u32 %s2091, 4
          %s2102 = int_to_ptr.vmem [resolvable:$true] %s2101
          %2104 = dma.vmem_to_hbm [thread:$0]  %s2102, 128, %s2099, %s2088
        $region64: #{tpu_custom_call.1} parent=51 // pred_fallthru
          _
      $region52: #{tpu_custom_call.1} parent=5 // pred_fallthru
        _
      %p2105 = scmp.le.s32.totalorder 2, %s17
      // Predicated region
      $region65: #{tpu_custom_call.1} parent=5 // pred_check
        %p2106 = pneg %p2105
      $region66: #{tpu_custom_call.1} parent=5 // pred_check_branch
        %2108 = sbr.rel (%p2106) target = $region68
      $region67: #{tpu_custom_call.1} parent=5 // pred_region
        %s2109 = ssub.s32 %s17, 2
        // Predicated region
        $region69: #{tpu_custom_call.1} parent=67 // pred_check
          %p2110 = pneg %p266
        $region70: #{tpu_custom_call.1} parent=67 // pred_check_branch
          %2112 = sbr.rel (%p2110) target = $region72
        $region71: #{tpu_custom_call.1} parent=67 // pred_region
          %s2113 = sand.u32 %s251, 1
          %s2114 = scalar_lea.sflag [#allocation4], %s2113
          %s2115 = sand.u32 %s251, 1
          %s2116 = smul.addr %s2115, 8
          %s2117 = scalar_lea.vmem [#allocation3], %s2116
          %2118 = dma.done %s2114, 128
        $region72: #{tpu_custom_call.1} parent=67 // pred_fallthru
          _
      $region68: #{tpu_custom_call.1} parent=5 // pred_fallthru
        _
    $region6: #{tpu_custom_call.1} parent=1 // loop_footer
      %s21 = sadd.s32 1, %s17
    $region7: #{tpu_custom_call.1} parent=1 // loop_footer_branch
      %16 = sbr.rel target = $region3
    $region8: #{tpu_custom_call.1} parent=1 // loop_exit
      _
    %2119 = vsyncpa [#allocation4], 1
    %s2120 = scalar_lea.sflag [#allocation4], 1
    %2121 = vsyncpa %s2120, 1

</llo_original>
